<compile_context>
chip_gen: v6e
topology: v6e:2x2x1
jax: 0.10.0
libtpu: 0.0.40
codegen_flags: <defaults>
</compile_context>

<pallas_src>
import numpy as np

import jax
import jax.numpy as jnp
from jax.experimental import pallas as pl
from jax.experimental.pallas import tpu as pltpu


def _conv_out(size, k, s):
    return (size - k) // s + 1


# ---------------------------------------------------------------------------
# Fused kernel body: conv1 -> conv2 -> conv3 -> dueling head for ONE frame.
# ---------------------------------------------------------------------------
def _dueling_dqn_kernel(col1_ref, w1_ref, b1_ref, s2_ref, w2_ref, b2_ref,
                        w3_ref, b3_ref, wh1_ref, bh1_ref, wh2_ref, bh2_ref,
                        coef_ref, q_ref, g_ref, f_ref):
    f32 = jnp.float32
    n_pos2, kc2 = g_ref.shape          # (Ho2*Wo2, 16*Cin2) = (9, 512)
    c2_in = w1_ref.shape[1]            # 32
    n_ij = kc2 // c2_in                # 16 conv2 kernel positions
    c2_out = w2_ref.shape[1]           # 64

    # conv1 (1/255 folded into w1): ONE (64,256)@(256,32) matmul + bias + ReLU.
    h1 = jnp.dot(col1_ref[0].astype(f32), w1_ref[...],
                 preferred_element_type=f32)
    h1 = jnp.maximum(h1 + b1_ref[...], 0.0)                       # (64, 32)

    # conv2 patch gather on the MXU (0/1 selector), then relayout the 16
    # kernel-position row groups into lane groups of a VMEM scratch so conv2
    # runs as ONE K=512 matmul instead of 16 tiny MXU pushes.
    g = jnp.dot(s2_ref[...].astype(f32), h1,
                preferred_element_type=f32)                       # (144, 32)
    for ij in range(n_ij):
        g_ref[:, ij * c2_in:(ij + 1) * c2_in] = \
            g[ij * n_pos2:(ij + 1) * n_pos2, :]
    h2 = jnp.dot(g_ref[...], w2_ref[...], preferred_element_type=f32)
    h2 = jnp.maximum(h2 + b2_ref[...], 0.0)                       # (9, 64)

    # conv3's 3x3 kernel covers the whole 3x3 map: relayout (9,64) -> (1,576)
    # lanes, then ONE K=576 matmul instead of 9 tiny ones.
    for p in range(n_pos2):
        f_ref[:, p * c2_out:(p + 1) * c2_out] = h2[p:p + 1, :]
    feat = jnp.dot(f_ref[...], w3_ref[...], preferred_element_type=f32)
    feat = jnp.maximum(feat + b3_ref[...], 0.0)                   # (1, 64)

    # Dueling head: fused value|advantage first layer, lane-padded second.
    h = jnp.dot(feat, wh1_ref[...], preferred_element_type=f32)
    h = jnp.maximum(h + bh1_ref[...], 0.0)                        # (1, 1024)
    va = jnp.dot(h, wh2_ref[...], preferred_element_type=f32) + bh2_ref[...]
    # coef = +1 on the value lane, -1/n_actions on advantage lanes, 0 elsewhere
    # => adj = V - mean(A).  Store the full 128-lane block unmasked.
    adj = jnp.sum(va * coef_ref[...], axis=1, keepdims=True)
    q_ref[0] = va + adj                                           # (1, 128)


def _fixed_spec(arr):
    nd = arr.ndim
    return pl.BlockSpec(arr.shape, lambda i: (0,) * nd)


# ---------------------------------------------------------------------------
# Wrapper-side input prep: space-to-depth -> conv1 im2col, batch-major.
# Pixels are 0..255 integers -> exact in bf16 (halves the per-step DMA).
# ---------------------------------------------------------------------------
def _build_col1(x_u8):
    xf = x_u8.astype(jnp.float32)                 # /255 is folded into weights
    n, c, hh, ww = xf.shape
    hb, wb = hh // 4, ww // 4
    ho1, wo1 = hb - 1, wb - 1                     # conv1: kernel 8, stride 4
    xs = xf.reshape(n, c, hb, 4, wb, 4).transpose(0, 2, 4, 3, 5, 1)
    xs = xs.reshape(n, hb, wb, 16 * c)            # (N, Hb, Wb, 4*4*C)
    blocks = [xs[:, a:a + ho1, b:b + wo1, :]
              for a in range(2) for b in range(2)]
    col1 = jnp.concatenate(blocks, axis=-1)       # (N, Ho1, Wo1, 64*C)
    return col1.reshape(n, ho1 * wo1, 64 * c).astype(jnp.bfloat16)


def dueling_dqn_forward(x_u8, kp, n_actions):
    n = x_u8.shape[0]
    col1 = _build_col1(x_u8)                      # (N, Ho1*Wo1, 64*C) bf16
    hw1, k1 = col1.shape[1], col1.shape[2]
    c2_in = kp["w1"].shape[1]
    kk2 = kp["w2"].shape[0] // c2_in              # 16
    c2_out = kp["w2"].shape[1]                    # 64
    n_pos2 = kp["w3"].shape[0] // c2_out          # 9

    args = (col1, kp["w1"], kp["b1"], kp["s2"], kp["w2"], kp["b2"],
            kp["w3"], kp["b3"], kp["wh1"], kp["bh1"], kp["wh2"], kp["bh2"],
            kp["coef"])
    in_specs = [pl.BlockSpec((1, hw1, k1), lambda i: (i, 0, 0))]
    in_specs += [_fixed_spec(a) for a in args[1:]]

    out = pl.pallas_call(
        _dueling_dqn_kernel,
        out_shape=jax.ShapeDtypeStruct((n, 1, 128), jnp.float32),
        grid_spec=pltpu.PrefetchScalarGridSpec(
            num_scalar_prefetch=0,
            grid=(n,),                            # one frame per grid step
            in_specs=in_specs,
            out_specs=pl.BlockSpec((1, 1, 128), lambda i: (i, 0, 0)),
            scratch_shapes=[
                pltpu.VMEM((n_pos2, kk2 * c2_in), jnp.float32),   # conv2 LHS
                pltpu.VMEM((1, n_pos2 * c2_out), jnp.float32),    # conv3 LHS
            ]),
        compiler_params=pltpu.CompilerParams(
            dimension_semantics=("parallel",),    # shards batch over v7x TCs
            vmem_limit_bytes=32 * 1024 * 1024),
    )(*args)
    return out[:, 0, :n_actions]


# ---------------------------------------------------------------------------
# One-time transform of torch-layout params into the fused-kernel layout.
# ---------------------------------------------------------------------------
def prepare_params(p, input_shape, n_actions):
    c, hh, ww = input_shape
    ho1, wo1 = _conv_out(hh, 8, 4), _conv_out(ww, 8, 4)
    ho2, wo2 = _conv_out(ho1, 4, 2), _conv_out(wo1, 4, 2)
    ho3, wo3 = _conv_out(ho2, 3, 1), _conv_out(wo2, 3, 1)
    assert hh % 4 == 0 and ww % 4 == 0
    assert n_actions < 128
    # TODO(synk): kernel assumes conv3's output is 1x1 (true for 36x36-class
    # frames); larger frames (e.g. 84x84) need a spatially tiled conv3.
    assert ho3 == 1 and wo3 == 1

    # conv1 weight in the (a, b, hr, wr, cin) im2col order used by _build_col1,
    # with the 1/255 input scale folded in (kept f32 for the 1e-3 check).
    w1 = p["cw1"].reshape(32, c, 2, 4, 2, 4)              # (co, ci, a, hr, b, wr)
    w1 = w1.transpose(2, 4, 3, 5, 1, 0).reshape(64 * c, 32) * (1.0 / 255.0)

    # conv2 / conv3 weights pre-flattened so each conv is ONE in-kernel matmul.
    w2 = p["cw2"].transpose(2, 3, 1, 0).reshape(16 * 32, 64)          # (512, 64)
    w3 = p["cw3"].transpose(2, 3, 1, 0).reshape(ho2 * wo2 * 64, 64)   # (576, 64)

    # Batch-independent 0/1 spatial selector (bf16 is lossless for 0/1):
    # row r = ij*9 + p picks the h1 row feeding conv2 kernel position ij at
    # conv2 output position p.
    ij = np.arange(16)
    ki, kj = ij // 4, ij % 4
    pos = np.arange(ho2 * wo2)
    oh, ow = pos // wo2, pos % wo2
    src = (2 * oh[None, :] + ki[:, None]) * wo1 + (2 * ow[None, :] + kj[:, None])
    src = src.reshape(-1)                                             # (144,)
    s2 = (src[:, None] == np.arange(ho1 * wo1)[None, :]).astype(np.float32)
    s2 = jnp.asarray(s2, dtype=jnp.bfloat16)                          # (144, 64)

    hidden = p["vw1"].shape[1]                                        # 512
    wh1 = jnp.concatenate([p["vw1"], p["aw1"]], axis=1)               # (F, 1024)
    bh1 = jnp.concatenate([p["vb1"], p["ab1"]]).reshape(1, 2 * hidden)

    # Lane-dense second head layer: 128 output lanes, advantage in columns
    # [0, n_actions), value in column n_actions, rest zero.
    wh2 = jnp.zeros((2 * hidden, 128), jnp.float32)
    wh2 = wh2.at[:hidden, n_actions:n_actions + 1].set(p["vw2"])
    wh2 = wh2.at[hidden:, :n_actions].set(p["aw2"])
    bh2 = jnp.zeros((1, 128), jnp.float32)
    bh2 = bh2.at[0, :n_actions].set(p["ab2"]).at[0, n_actions].set(p["vb2"][0])

    # coef so that sum(va * coef, lanes) = V - mean(A).
    coef = np.zeros((1, 128), np.float32)
    coef[0, :n_actions] = -1.0 / n_actions
    coef[0, n_actions] = 1.0

    return {
        "w1": w1, "b1": p["cb1"].reshape(1, 32),
        "s2": s2, "w2": w2, "b2": p["cb2"].reshape(1, 64),
        "w3": w3, "b3": p["cb3"].reshape(1, 64),
        "wh1": wh1, "bh1": bh1, "wh2": wh2, "bh2": bh2,
        "coef": jnp.asarray(coef),
    }


# ---------------------------------------------------------------------------
# Parameters (deterministic, synthetic) & pure-JAX reference.
# ---------------------------------------------------------------------------
def init_params(key, input_shape, n_actions, conv_out_size):
    ks = jax.random.split(key, 14)

    def u(k, shape, fan_in):
        bound = 1.0 / jnp.sqrt(fan_in)
        return jax.random.uniform(k, shape, jnp.float32, -bound, bound)

    c_in = input_shape[0]
    return {
        "cw1": u(ks[0], (32, c_in, 8, 8), c_in * 64), "cb1": u(ks[1], (32,), c_in * 64),
        "cw2": u(ks[2], (64, 32, 4, 4), 32 * 16),     "cb2": u(ks[3], (64,), 32 * 16),
        "cw3": u(ks[4], (64, 64, 3, 3), 64 * 9),      "cb3": u(ks[5], (64,), 64 * 9),
        "vw1": u(ks[6], (conv_out_size, 512), conv_out_size), "vb1": u(ks[7], (512,), conv_out_size),
        "vw2": u(ks[8], (512, 1), 512),               "vb2": u(ks[9], (1,), 512),
        "aw1": u(ks[10], (conv_out_size, 512), conv_out_size), "ab1": u(ks[11], (512,), conv_out_size),
        "aw2": u(ks[12], (512, n_actions), 512),      "ab2": u(ks[13], (n_actions,), 512),
    }


def ref_forward(x_u8, p):
    h = x_u8.astype(jnp.float32) / 255.0
    for w, b, s in [(p["cw1"], p["cb1"], 4), (p["cw2"], p["cb2"], 2), (p["cw3"], p["cb3"], 1)]:
        h = jax.lax.conv_general_dilated(h, w, (s, s), "VALID",
                                         dimension_numbers=("NCHW", "OIHW", "NCHW"))
        h = jnp.maximum(h + b.reshape(1, -1, 1, 1), 0.0)
    f = h.reshape(h.shape[0], -1)
    hv = jnp.maximum(f @ p["vw1"] + p["vb1"], 0.0)
    v = hv @ p["vw2"] + p["vb2"]
    ha = jnp.maximum(f @ p["aw1"] + p["ab1"], 0.0)
    a = ha @ p["aw2"] + p["ab2"]
    return v + a - a.mean(axis=1, keepdims=True)


if __name__ == "__main__":
    batch = 2
    input_shape = (4, 36, 36)   # small Atari-like frame stack; conv chain: 36->8->3->1
    n_actions = 6
    conv_out_size = 64 * 1 * 1  # matches _get_conv_out for this input_shape

    params = init_params(jax.random.PRNGKey(0), input_shape, n_actions, conv_out_size)
    kparams = prepare_params(params, input_shape, n_actions)

    x = jax.random.randint(jax.random.PRNGKey(1), (batch,) + input_shape, 0, 256,
                           dtype=jnp.int32).astype(jnp.uint8)

    fwd = jax.jit(dueling_dqn_forward, static_argnums=2)
    q = jax.block_until_ready(fwd(x, kparams, n_actions))

    q_ref = ref_forward(x, params)
    assert q.shape == (batch, n_actions)
    assert bool(jnp.all(jnp.isfinite(q)))
    assert bool(jnp.allclose(q, q_ref, atol=1e-3, rtol=1e-3))
    print("KERNEL_OK")
</pallas_src>

<mosaic_0001>
module attributes {stable_mosaic.version = 11 : i64} {
  func.func @_dueling_dqn_kernel(%arg0: i32, %arg1: memref<1x64x256xbf16, #tpu.memory_space<vmem>>, %arg2: memref<256x32xf32, #tpu.memory_space<vmem>>, %arg3: memref<1x32xf32, #tpu.memory_space<vmem>>, %arg4: memref<144x64xbf16, #tpu.memory_space<vmem>>, %arg5: memref<512x64xf32, #tpu.memory_space<vmem>>, %arg6: memref<1x64xf32, #tpu.memory_space<vmem>>, %arg7: memref<576x64xf32, #tpu.memory_space<vmem>>, %arg8: memref<1x64xf32, #tpu.memory_space<vmem>>, %arg9: memref<64x1024xf32, #tpu.memory_space<vmem>>, %arg10: memref<1x1024xf32, #tpu.memory_space<vmem>>, %arg11: memref<1024x128xf32, #tpu.memory_space<vmem>>, %arg12: memref<1x128xf32, #tpu.memory_space<vmem>>, %arg13: memref<1x128xf32, #tpu.memory_space<vmem>>, %arg14: memref<1x1x128xf32, #tpu.memory_space<vmem>>, %arg15: memref<9x512xf32, #tpu.memory_space<vmem>>, %arg16: memref<1x576xf32, #tpu.memory_space<vmem>>) attributes {dimension_semantics = [#tpu.dimension_semantics<parallel>], iteration_bounds = array<i64: 2>, scalar_prefetch = 0 : i64, scratch_operands = 2 : i64, tpu.core_type = #tpu.core_type<tc>, window_params = [{transform_indices = @transform_0, window_bounds = array<i64: 1, 64, 256>}, {pipeline_mode = #tpu.pipeline_mode<synchronous>, transform_indices = @transform_1, window_bounds = array<i64: 256, 32>}, {pipeline_mode = #tpu.pipeline_mode<synchronous>, transform_indices = @transform_2, window_bounds = array<i64: 1, 32>}, {pipeline_mode = #tpu.pipeline_mode<synchronous>, transform_indices = @transform_3, window_bounds = array<i64: 144, 64>}, {pipeline_mode = #tpu.pipeline_mode<synchronous>, transform_indices = @transform_4, window_bounds = array<i64: 512, 64>}, {pipeline_mode = #tpu.pipeline_mode<synchronous>, transform_indices = @transform_5, window_bounds = array<i64: 1, 64>}, {pipeline_mode = #tpu.pipeline_mode<synchronous>, transform_indices = @transform_6, window_bounds = array<i64: 576, 64>}, {pipeline_mode = #tpu.pipeline_mode<synchronous>, transform_indices = @transform_7, window_bounds = array<i64: 1, 64>}, {pipeline_mode = #tpu.pipeline_mode<synchronous>, transform_indices = @transform_8, window_bounds = array<i64: 64, 1024>}, {pipeline_mode = #tpu.pipeline_mode<synchronous>, transform_indices = @transform_9, window_bounds = array<i64: 1, 1024>}, {pipeline_mode = #tpu.pipeline_mode<synchronous>, transform_indices = @transform_10, window_bounds = array<i64: 1024, 128>}, {pipeline_mode = #tpu.pipeline_mode<synchronous>, transform_indices = @transform_11, window_bounds = array<i64: 1, 128>}, {pipeline_mode = #tpu.pipeline_mode<synchronous>, transform_indices = @transform_12, window_bounds = array<i64: 1, 128>}, {transform_indices = @transform_13, window_bounds = array<i64: 1, 1, 128>}]} {
    %c0 = arith.constant 0 : index
    %c0_0 = arith.constant 0 : index
    %c0_1 = arith.constant 0 : index
    %0 = vector.load %arg1[%c0, %c0_0, %c0_1] : memref<1x64x256xbf16, #tpu.memory_space<vmem>>, vector<1x64x256xbf16>
    %1 = vector.shape_cast %0 : vector<1x64x256xbf16> to vector<64x256xbf16>
    %2 = arith.extf %1 : vector<64x256xbf16> to vector<64x256xf32>
    %c0_2 = arith.constant 0 : index
    %c0_3 = arith.constant 0 : index
    %3 = vector.load %arg2[%c0_2, %c0_3] : memref<256x32xf32, #tpu.memory_space<vmem>>, vector<256x32xf32>
    %cst = arith.constant dense<0.000000e+00> : vector<64x32xf32>
    %4 = tpu.matmul %2, %3, %cst {dimension_numbers = #tpu.dot_dimension_numbers<[1], [0], [0], [1], [0, 0, 1, 1], [], []>} : vector<64x256xf32>, vector<256x32xf32>, vector<64x32xf32> -> vector<64x32xf32>
    %c0_4 = arith.constant 0 : index
    %c0_5 = arith.constant 0 : index
    %5 = vector.load %arg3[%c0_4, %c0_5] : memref<1x32xf32, #tpu.memory_space<vmem>>, vector<1x32xf32>
    %6 = vector.broadcast %5 : vector<1x32xf32> to vector<64x32xf32>
    %7 = arith.addf %4, %6 : vector<64x32xf32>
    %cst_6 = arith.constant 0.000000e+00 : f32
    %8 = vector.broadcast %cst_6 : f32 to vector<64x32xf32>
    %9 = arith.maximumf %7, %8 : vector<64x32xf32>
    %c0_7 = arith.constant 0 : index
    %c0_8 = arith.constant 0 : index
    %10 = vector.load %arg4[%c0_7, %c0_8] : memref<144x64xbf16, #tpu.memory_space<vmem>>, vector<144x64xbf16>
    %11 = arith.extf %10 : vector<144x64xbf16> to vector<144x64xf32>
    %cst_9 = arith.constant dense<0.000000e+00> : vector<144x32xf32>
    %12 = tpu.matmul %11, %9, %cst_9 {dimension_numbers = #tpu.dot_dimension_numbers<[1], [0], [0], [1], [0, 0, 1, 1], [], []>} : vector<144x64xf32>, vector<64x32xf32>, vector<144x32xf32> -> vector<144x32xf32>
    %13 = vector.extract_strided_slice %12 {offsets = [0, 0], sizes = [9, 32], strides = [1, 1]} : vector<144x32xf32> to vector<9x32xf32>
    %c0_10 = arith.constant 0 : index
    %c0_11 = arith.constant 0 : index
    %14 = vector.load %arg15[%c0_10, %c0_11] : memref<9x512xf32, #tpu.memory_space<vmem>>, vector<9x32xf32>
    tpu.vector_store %arg15[%c0_10, %c0_11], %13 {strides = array<i32>} : memref<9x512xf32, #tpu.memory_space<vmem>>, vector<9x32xf32>,
    %15 = vector.extract_strided_slice %12 {offsets = [9, 0], sizes = [9, 32], strides = [1, 1]} : vector<144x32xf32> to vector<9x32xf32>
    %c0_12 = arith.constant 0 : index
    %c32 = arith.constant 32 : index
    %16 = vector.load %arg15[%c0_12, %c32] : memref<9x512xf32, #tpu.memory_space<vmem>>, vector<9x32xf32>
    tpu.vector_store %arg15[%c0_12, %c32], %15 {strides = array<i32>} : memref<9x512xf32, #tpu.memory_space<vmem>>, vector<9x32xf32>,
    %17 = vector.extract_strided_slice %12 {offsets = [18, 0], sizes = [9, 32], strides = [1, 1]} : vector<144x32xf32> to vector<9x32xf32>
    %c0_13 = arith.constant 0 : index
    %c64 = arith.constant 64 : index
    %18 = vector.load %arg15[%c0_13, %c64] : memref<9x512xf32, #tpu.memory_space<vmem>>, vector<9x32xf32>
    tpu.vector_store %arg15[%c0_13, %c64], %17 {strides = array<i32>} : memref<9x512xf32, #tpu.memory_space<vmem>>, vector<9x32xf32>,
    %19 = vector.extract_strided_slice %12 {offsets = [27, 0], sizes = [9, 32], strides = [1, 1]} : vector<144x32xf32> to vector<9x32xf32>
    %c0_14 = arith.constant 0 : index
    %c96 = arith.constant 96 : index
    %20 = vector.load %arg15[%c0_14, %c96] : memref<9x512xf32, #tpu.memory_space<vmem>>, vector<9x32xf32>
    tpu.vector_store %arg15[%c0_14, %c96], %19 {strides = array<i32>} : memref<9x512xf32, #tpu.memory_space<vmem>>, vector<9x32xf32>,
    %21 = vector.extract_strided_slice %12 {offsets = [36, 0], sizes = [9, 32], strides = [1, 1]} : vector<144x32xf32> to vector<9x32xf32>
    %c0_15 = arith.constant 0 : index
    %c128 = arith.constant 128 : index
    %22 = vector.load %arg15[%c0_15, %c128] : memref<9x512xf32, #tpu.memory_space<vmem>>, vector<9x32xf32>
    tpu.vector_store %arg15[%c0_15, %c128], %21 {strides = array<i32>} : memref<9x512xf32, #tpu.memory_space<vmem>>, vector<9x32xf32>,
    %23 = vector.extract_strided_slice %12 {offsets = [45, 0], sizes = [9, 32], strides = [1, 1]} : vector<144x32xf32> to vector<9x32xf32>
    %c0_16 = arith.constant 0 : index
    %c160 = arith.constant 160 : index
    %24 = vector.load %arg15[%c0_16, %c160] : memref<9x512xf32, #tpu.memory_space<vmem>>, vector<9x32xf32>
    tpu.vector_store %arg15[%c0_16, %c160], %23 {strides = array<i32>} : memref<9x512xf32, #tpu.memory_space<vmem>>, vector<9x32xf32>,
    %25 = vector.extract_strided_slice %12 {offsets = [54, 0], sizes = [9, 32], strides = [1, 1]} : vector<144x32xf32> to vector<9x32xf32>
    %c0_17 = arith.constant 0 : index
    %c192 = arith.constant 192 : index
    %26 = vector.load %arg15[%c0_17, %c192] : memref<9x512xf32, #tpu.memory_space<vmem>>, vector<9x32xf32>
    tpu.vector_store %arg15[%c0_17, %c192], %25 {strides = array<i32>} : memref<9x512xf32, #tpu.memory_space<vmem>>, vector<9x32xf32>,
    %27 = vector.extract_strided_slice %12 {offsets = [63, 0], sizes = [9, 32], strides = [1, 1]} : vector<144x32xf32> to vector<9x32xf32>
    %c0_18 = arith.constant 0 : index
    %c224 = arith.constant 224 : index
    %28 = vector.load %arg15[%c0_18, %c224] : memref<9x512xf32, #tpu.memory_space<vmem>>, vector<9x32xf32>
    tpu.vector_store %arg15[%c0_18, %c224], %27 {strides = array<i32>} : memref<9x512xf32, #tpu.memory_space<vmem>>, vector<9x32xf32>,
    %29 = vector.extract_strided_slice %12 {offsets = [72, 0], sizes = [9, 32], strides = [1, 1]} : vector<144x32xf32> to vector<9x32xf32>
    %c0_19 = arith.constant 0 : index
    %c256 = arith.constant 256 : index
    %30 = vector.load %arg15[%c0_19, %c256] : memref<9x512xf32, #tpu.memory_space<vmem>>, vector<9x32xf32>
    tpu.vector_store %arg15[%c0_19, %c256], %29 {strides = array<i32>} : memref<9x512xf32, #tpu.memory_space<vmem>>, vector<9x32xf32>,
    %31 = vector.extract_strided_slice %12 {offsets = [81, 0], sizes = [9, 32], strides = [1, 1]} : vector<144x32xf32> to vector<9x32xf32>
    %c0_20 = arith.constant 0 : index
    %c288 = arith.constant 288 : index
    %32 = vector.load %arg15[%c0_20, %c288] : memref<9x512xf32, #tpu.memory_space<vmem>>, vector<9x32xf32>
    tpu.vector_store %arg15[%c0_20, %c288], %31 {strides = array<i32>} : memref<9x512xf32, #tpu.memory_space<vmem>>, vector<9x32xf32>,
    %33 = vector.extract_strided_slice %12 {offsets = [90, 0], sizes = [9, 32], strides = [1, 1]} : vector<144x32xf32> to vector<9x32xf32>
    %c0_21 = arith.constant 0 : index
    %c320 = arith.constant 320 : index
    %34 = vector.load %arg15[%c0_21, %c320] : memref<9x512xf32, #tpu.memory_space<vmem>>, vector<9x32xf32>
    tpu.vector_store %arg15[%c0_21, %c320], %33 {strides = array<i32>} : memref<9x512xf32, #tpu.memory_space<vmem>>, vector<9x32xf32>,
    %35 = vector.extract_strided_slice %12 {offsets = [99, 0], sizes = [9, 32], strides = [1, 1]} : vector<144x32xf32> to vector<9x32xf32>
    %c0_22 = arith.constant 0 : index
    %c352 = arith.constant 352 : index
    %36 = vector.load %arg15[%c0_22, %c352] : memref<9x512xf32, #tpu.memory_space<vmem>>, vector<9x32xf32>
    tpu.vector_store %arg15[%c0_22, %c352], %35 {strides = array<i32>} : memref<9x512xf32, #tpu.memory_space<vmem>>, vector<9x32xf32>,
    %37 = vector.extract_strided_slice %12 {offsets = [108, 0], sizes = [9, 32], strides = [1, 1]} : vector<144x32xf32> to vector<9x32xf32>
    %c0_23 = arith.constant 0 : index
    %c384 = arith.constant 384 : index
    %38 = vector.load %arg15[%c0_23, %c384] : memref<9x512xf32, #tpu.memory_space<vmem>>, vector<9x32xf32>
    tpu.vector_store %arg15[%c0_23, %c384], %37 {strides = array<i32>} : memref<9x512xf32, #tpu.memory_space<vmem>>, vector<9x32xf32>,
    %39 = vector.extract_strided_slice %12 {offsets = [117, 0], sizes = [9, 32], strides = [1, 1]} : vector<144x32xf32> to vector<9x32xf32>
    %c0_24 = arith.constant 0 : index
    %c416 = arith.constant 416 : index
    %40 = vector.load %arg15[%c0_24, %c416] : memref<9x512xf32, #tpu.memory_space<vmem>>, vector<9x32xf32>
    tpu.vector_store %arg15[%c0_24, %c416], %39 {strides = array<i32>} : memref<9x512xf32, #tpu.memory_space<vmem>>, vector<9x32xf32>,
    %41 = vector.extract_strided_slice %12 {offsets = [126, 0], sizes = [9, 32], strides = [1, 1]} : vector<144x32xf32> to vector<9x32xf32>
    %c0_25 = arith.constant 0 : index
    %c448 = arith.constant 448 : index
    %42 = vector.load %arg15[%c0_25, %c448] : memref<9x512xf32, #tpu.memory_space<vmem>>, vector<9x32xf32>
    tpu.vector_store %arg15[%c0_25, %c448], %41 {strides = array<i32>} : memref<9x512xf32, #tpu.memory_space<vmem>>, vector<9x32xf32>,
    %43 = vector.extract_strided_slice %12 {offsets = [135, 0], sizes = [9, 32], strides = [1, 1]} : vector<144x32xf32> to vector<9x32xf32>
    %c0_26 = arith.constant 0 : index
    %c480 = arith.constant 480 : index
    %44 = vector.load %arg15[%c0_26, %c480] : memref<9x512xf32, #tpu.memory_space<vmem>>, vector<9x32xf32>
    tpu.vector_store %arg15[%c0_26, %c480], %43 {strides = array<i32>} : memref<9x512xf32, #tpu.memory_space<vmem>>, vector<9x32xf32>,
    %c0_27 = arith.constant 0 : index
    %c0_28 = arith.constant 0 : index
    %45 = vector.load %arg15[%c0_27, %c0_28] : memref<9x512xf32, #tpu.memory_space<vmem>>, vector<9x512xf32>
    %c0_29 = arith.constant 0 : index
    %c0_30 = arith.constant 0 : index
    %46 = vector.load %arg5[%c0_29, %c0_30] : memref<512x64xf32, #tpu.memory_space<vmem>>, vector<512x64xf32>
    %cst_31 = arith.constant dense<0.000000e+00> : vector<9x64xf32>
    %47 = tpu.matmul %45, %46, %cst_31 {dimension_numbers = #tpu.dot_dimension_numbers<[1], [0], [0], [1], [0, 0, 1, 1], [], []>} : vector<9x512xf32>, vector<512x64xf32>, vector<9x64xf32> -> vector<9x64xf32>
    %c0_32 = arith.constant 0 : index
    %c0_33 = arith.constant 0 : index
    %48 = vector.load %arg6[%c0_32, %c0_33] : memref<1x64xf32, #tpu.memory_space<vmem>>, vector<1x64xf32>
    %49 = vector.broadcast %48 : vector<1x64xf32> to vector<9x64xf32>
    %50 = arith.addf %47, %49 : vector<9x64xf32>
    %cst_34 = arith.constant 0.000000e+00 : f32
    %51 = vector.broadcast %cst_34 : f32 to vector<9x64xf32>
    %52 = arith.maximumf %50, %51 : vector<9x64xf32>
    %53 = vector.extract_strided_slice %52 {offsets = [0, 0], sizes = [1, 64], strides = [1, 1]} : vector<9x64xf32> to vector<1x64xf32>
    %c0_35 = arith.constant 0 : index
    %c0_36 = arith.constant 0 : index
    %54 = vector.load %arg16[%c0_35, %c0_36] : memref<1x576xf32, #tpu.memory_space<vmem>>, vector<1x64xf32>
    tpu.vector_store %arg16[%c0_35, %c0_36], %53 {strides = array<i32>} : memref<1x576xf32, #tpu.memory_space<vmem>>, vector<1x64xf32>,
    %55 = vector.extract_strided_slice %52 {offsets = [1, 0], sizes = [1, 64], strides = [1, 1]} : vector<9x64xf32> to vector<1x64xf32>
    %c0_37 = arith.constant 0 : index
    %c64_38 = arith.constant 64 : index
    %56 = vector.load %arg16[%c0_37, %c64_38] : memref<1x576xf32, #tpu.memory_space<vmem>>, vector<1x64xf32>
    tpu.vector_store %arg16[%c0_37, %c64_38], %55 {strides = array<i32>} : memref<1x576xf32, #tpu.memory_space<vmem>>, vector<1x64xf32>,
    %57 = vector.extract_strided_slice %52 {offsets = [2, 0], sizes = [1, 64], strides = [1, 1]} : vector<9x64xf32> to vector<1x64xf32>
    %c0_39 = arith.constant 0 : index
    %c128_40 = arith.constant 128 : index
    %58 = vector.load %arg16[%c0_39, %c128_40] : memref<1x576xf32, #tpu.memory_space<vmem>>, vector<1x64xf32>
    tpu.vector_store %arg16[%c0_39, %c128_40], %57 {strides = array<i32>} : memref<1x576xf32, #tpu.memory_space<vmem>>, vector<1x64xf32>,
    %59 = vector.extract_strided_slice %52 {offsets = [3, 0], sizes = [1, 64], strides = [1, 1]} : vector<9x64xf32> to vector<1x64xf32>
    %c0_41 = arith.constant 0 : index
    %c192_42 = arith.constant 192 : index
    %60 = vector.load %arg16[%c0_41, %c192_42] : memref<1x576xf32, #tpu.memory_space<vmem>>, vector<1x64xf32>
    tpu.vector_store %arg16[%c0_41, %c192_42], %59 {strides = array<i32>} : memref<1x576xf32, #tpu.memory_space<vmem>>, vector<1x64xf32>,
    %61 = vector.extract_strided_slice %52 {offsets = [4, 0], sizes = [1, 64], strides = [1, 1]} : vector<9x64xf32> to vector<1x64xf32>
    %c0_43 = arith.constant 0 : index
    %c256_44 = arith.constant 256 : index
    %62 = vector.load %arg16[%c0_43, %c256_44] : memref<1x576xf32, #tpu.memory_space<vmem>>, vector<1x64xf32>
    tpu.vector_store %arg16[%c0_43, %c256_44], %61 {strides = array<i32>} : memref<1x576xf32, #tpu.memory_space<vmem>>, vector<1x64xf32>,
    %63 = vector.extract_strided_slice %52 {offsets = [5, 0], sizes = [1, 64], strides = [1, 1]} : vector<9x64xf32> to vector<1x64xf32>
    %c0_45 = arith.constant 0 : index
    %c320_46 = arith.constant 320 : index
    %64 = vector.load %arg16[%c0_45, %c320_46] : memref<1x576xf32, #tpu.memory_space<vmem>>, vector<1x64xf32>
    tpu.vector_store %arg16[%c0_45, %c320_46], %63 {strides = array<i32>} : memref<1x576xf32, #tpu.memory_space<vmem>>, vector<1x64xf32>,
    %65 = vector.extract_strided_slice %52 {offsets = [6, 0], sizes = [1, 64], strides = [1, 1]} : vector<9x64xf32> to vector<1x64xf32>
    %c0_47 = arith.constant 0 : index
    %c384_48 = arith.constant 384 : index
    %66 = vector.load %arg16[%c0_47, %c384_48] : memref<1x576xf32, #tpu.memory_space<vmem>>, vector<1x64xf32>
    tpu.vector_store %arg16[%c0_47, %c384_48], %65 {strides = array<i32>} : memref<1x576xf32, #tpu.memory_space<vmem>>, vector<1x64xf32>,
    %67 = vector.extract_strided_slice %52 {offsets = [7, 0], sizes = [1, 64], strides = [1, 1]} : vector<9x64xf32> to vector<1x64xf32>
    %c0_49 = arith.constant 0 : index
    %c448_50 = arith.constant 448 : index
    %68 = vector.load %arg16[%c0_49, %c448_50] : memref<1x576xf32, #tpu.memory_space<vmem>>, vector<1x64xf32>
    tpu.vector_store %arg16[%c0_49, %c448_50], %67 {strides = array<i32>} : memref<1x576xf32, #tpu.memory_space<vmem>>, vector<1x64xf32>,
    %69 = vector.extract_strided_slice %52 {offsets = [8, 0], sizes = [1, 64], strides = [1, 1]} : vector<9x64xf32> to vector<1x64xf32>
    %c0_51 = arith.constant 0 : index
    %c512 = arith.constant 512 : index
    %70 = vector.load %arg16[%c0_51, %c512] : memref<1x576xf32, #tpu.memory_space<vmem>>, vector<1x64xf32>
    tpu.vector_store %arg16[%c0_51, %c512], %69 {strides = array<i32>} : memref<1x576xf32, #tpu.memory_space<vmem>>, vector<1x64xf32>,
    %c0_52 = arith.constant 0 : index
    %c0_53 = arith.constant 0 : index
    %71 = vector.load %arg16[%c0_52, %c0_53] : memref<1x576xf32, #tpu.memory_space<vmem>>, vector<1x576xf32>
    %c0_54 = arith.constant 0 : index
    %c0_55 = arith.constant 0 : index
    %72 = vector.load %arg7[%c0_54, %c0_55] : memref<576x64xf32, #tpu.memory_space<vmem>>, vector<576x64xf32>
    %cst_56 = arith.constant dense<0.000000e+00> : vector<1x64xf32>
    %73 = tpu.matmul %71, %72, %cst_56 {dimension_numbers = #tpu.dot_dimension_numbers<[1], [0], [0], [1], [0, 0, 1, 1], [], []>} : vector<1x576xf32>, vector<576x64xf32>, vector<1x64xf32> -> vector<1x64xf32>
    %c0_57 = arith.constant 0 : index
    %c0_58 = arith.constant 0 : index
    %74 = vector.load %arg8[%c0_57, %c0_58] : memref<1x64xf32, #tpu.memory_space<vmem>>, vector<1x64xf32>
    %75 = arith.addf %73, %74 : vector<1x64xf32>
    %cst_59 = arith.constant 0.000000e+00 : f32
    %76 = vector.broadcast %cst_59 : f32 to vector<1x64xf32>
    %77 = arith.maximumf %75, %76 : vector<1x64xf32>
    %c0_60 = arith.constant 0 : index
    %c0_61 = arith.constant 0 : index
    %78 = vector.load %arg9[%c0_60, %c0_61] : memref<64x1024xf32, #tpu.memory_space<vmem>>, vector<64x1024xf32>
    %cst_62 = arith.constant dense<0.000000e+00> : vector<1x1024xf32>
    %79 = tpu.matmul %77, %78, %cst_62 {dimension_numbers = #tpu.dot_dimension_numbers<[1], [0], [0], [1], [0, 0, 1, 1], [], []>} : vector<1x64xf32>, vector<64x1024xf32>, vector<1x1024xf32> -> vector<1x1024xf32>
    %c0_63 = arith.constant 0 : index
    %c0_64 = arith.constant 0 : index
    %80 = vector.load %arg10[%c0_63, %c0_64] : memref<1x1024xf32, #tpu.memory_space<vmem>>, vector<1x1024xf32>
    %81 = arith.addf %79, %80 : vector<1x1024xf32>
    %cst_65 = arith.constant 0.000000e+00 : f32
    %82 = vector.broadcast %cst_65 : f32 to vector<1x1024xf32>
    %83 = arith.maximumf %81, %82 : vector<1x1024xf32>
    %c0_66 = arith.constant 0 : index
    %c0_67 = arith.constant 0 : index
    %84 = vector.load %arg11[%c0_66, %c0_67] : memref<1024x128xf32, #tpu.memory_space<vmem>>, vector<1024x128xf32>
    %cst_68 = arith.constant dense<0.000000e+00> : vector<1x128xf32>
    %85 = tpu.matmul %83, %84, %cst_68 {dimension_numbers = #tpu.dot_dimension_numbers<[1], [0], [0], [1], [0, 0, 1, 1], [], []>} : vector<1x1024xf32>, vector<1024x128xf32>, vector<1x128xf32> -> vector<1x128xf32>
    %c0_69 = arith.constant 0 : index
    %c0_70 = arith.constant 0 : index
    %86 = vector.load %arg12[%c0_69, %c0_70] : memref<1x128xf32, #tpu.memory_space<vmem>>, vector<1x128xf32>
    %87 = arith.addf %85, %86 : vector<1x128xf32>
    %c0_71 = arith.constant 0 : index
    %c0_72 = arith.constant 0 : index
    %88 = vector.load %arg13[%c0_71, %c0_72] : memref<1x128xf32, #tpu.memory_space<vmem>>, vector<1x128xf32>
    %89 = arith.mulf %87, %88 : vector<1x128xf32>
    %cst_73 = arith.constant dense<0.000000e+00> : vector<1xf32>
    %90 = vector.multi_reduction <add>, %89, %cst_73 [1] : vector<1x128xf32> to vector<1xf32>
    %91 = vector.shape_cast %90 : vector<1xf32> to vector<1x1xf32>
    %92 = vector.broadcast %91 : vector<1x1xf32> to vector<1x128xf32>
    %93 = arith.addf %87, %92 : vector<1x128xf32>
    %c0_74 = arith.constant 0 : index
    %c0_75 = arith.constant 0 : index
    %c0_76 = arith.constant 0 : index
    %94 = vector.load %arg14[%c0_74, %c0_75, %c0_76] : memref<1x1x128xf32, #tpu.memory_space<vmem>>, vector<1x1x128xf32>
    %95 = vector.shape_cast %94 : vector<1x1x128xf32> to vector<1x128xf32>
    %96 = vector.shape_cast %93 : vector<1x128xf32> to vector<1x1x128xf32>
    tpu.vector_store %arg14[%c0_74, %c0_75, %c0_76], %96 {strides = array<i32>} : memref<1x1x128xf32, #tpu.memory_space<vmem>>, vector<1x1x128xf32>,
    return
  }
  func.func @transform_0(%arg0: i32) -> (i32, i32, i32) {
    %c0_i32 = arith.constant 0 : i32
    %c0_i32_0 = arith.constant 0 : i32
    %c0_i32_1 = arith.constant 0 : i32
    return %arg0, %c0_i32, %c0_i32_0 : i32, i32, i32
  }
  func.func @transform_1(%arg0: i32) -> (i32, i32) {
    %c0_i32 = arith.constant 0 : i32
    %c0_i32_0 = arith.constant 0 : i32
    %c0_i32_1 = arith.constant 0 : i32
    return %c0_i32, %c0_i32_0 : i32, i32
  }
  func.func @transform_2(%arg0: i32) -> (i32, i32) {
    %c0_i32 = arith.constant 0 : i32
    %c0_i32_0 = arith.constant 0 : i32
    %c0_i32_1 = arith.constant 0 : i32
    return %c0_i32, %c0_i32_0 : i32, i32
  }
  func.func @transform_3(%arg0: i32) -> (i32, i32) {
    %c0_i32 = arith.constant 0 : i32
    %c0_i32_0 = arith.constant 0 : i32
    %c0_i32_1 = arith.constant 0 : i32
    return %c0_i32, %c0_i32_0 : i32, i32
  }
  func.func @transform_4(%arg0: i32) -> (i32, i32) {
    %c0_i32 = arith.constant 0 : i32
    %c0_i32_0 = arith.constant 0 : i32
    %c0_i32_1 = arith.constant 0 : i32
    return %c0_i32, %c0_i32_0 : i32, i32
  }
  func.func @transform_5(%arg0: i32) -> (i32, i32) {
    %c0_i32 = arith.constant 0 : i32
    %c0_i32_0 = arith.constant 0 : i32
    %c0_i32_1 = arith.constant 0 : i32
    return %c0_i32, %c0_i32_0 : i32, i32
  }
  func.func @transform_6(%arg0: i32) -> (i32, i32) {
    %c0_i32 = arith.constant 0 : i32
    %c0_i32_0 = arith.constant 0 : i32
    %c0_i32_1 = arith.constant 0 : i32
    return %c0_i32, %c0_i32_0 : i32, i32
  }
  func.func @transform_7(%arg0: i32) -> (i32, i32) {
    %c0_i32 = arith.constant 0 : i32
    %c0_i32_0 = arith.constant 0 : i32
    %c0_i32_1 = arith.constant 0 : i32
    return %c0_i32, %c0_i32_0 : i32, i32
  }
  func.func @transform_8(%arg0: i32) -> (i32, i32) {
    %c0_i32 = arith.constant 0 : i32
    %c0_i32_0 = arith.constant 0 : i32
    %c0_i32_1 = arith.constant 0 : i32
    return %c0_i32, %c0_i32_0 : i32, i32
  }
  func.func @transform_9(%arg0: i32) -> (i32, i32) {
    %c0_i32 = arith.constant 0 : i32
    %c0_i32_0 = arith.constant 0 : i32
    %c0_i32_1 = arith.constant 0 : i32
    return %c0_i32, %c0_i32_0 : i32, i32
  }
  func.func @transform_10(%arg0: i32) -> (i32, i32) {
    %c0_i32 = arith.constant 0 : i32
    %c0_i32_0 = arith.constant 0 : i32
    %c0_i32_1 = arith.constant 0 : i32
    return %c0_i32, %c0_i32_0 : i32, i32
  }
  func.func @transform_11(%arg0: i32) -> (i32, i32) {
    %c0_i32 = arith.constant 0 : i32
    %c0_i32_0 = arith.constant 0 : i32
    %c0_i32_1 = arith.constant 0 : i32
    return %c0_i32, %c0_i32_0 : i32, i32
  }
  func.func @transform_12(%arg0: i32) -> (i32, i32) {
    %c0_i32 = arith.constant 0 : i32
    %c0_i32_0 = arith.constant 0 : i32
    %c0_i32_1 = arith.constant 0 : i32
    return %c0_i32, %c0_i32_0 : i32, i32
  }
  func.func @transform_13(%arg0: i32) -> (i32, i32, i32) {
    %c0_i32 = arith.constant 0 : i32
    %c0_i32_0 = arith.constant 0 : i32
    %c0_i32_1 = arith.constant 0 : i32
    return %arg0, %c0_i32, %c0_i32_0 : i32, i32, i32
  }
}

</mosaic_0001>

<llo_original>
// kernel: dueling_dqn_forward.1
$region0: #{dueling_dqn_forward.1}
  #allocation0 [shape = 'u32[]', space=smem, size = 0x4, offset = 0x4, fixed_abs, tag = 'smem constant byte address 0x4 - core index']
  #allocation1 [shape = 'u32[144,128]{1,0:T(1,128)}', space=vmem, size = 0x12000, scoped, tag = 'internal scratch']
  #allocation2 [shape = 'f32[9,512]{1,0:T(8,128)}', space=vmem, size = 0x8000, scoped, tag = 'scratch operand']
  #allocation3 [shape = 'f32[1,576]{1,0:T(1,128)}', space=vmem, size = 0xa00, scoped, tag = 'scratch operand']
  %s0 = inlined_call_operand.vmem [shape: bf16[2,64,256], index: 0, kind: input, shape index: {}]
  %s1 = inlined_call_operand.vmem [shape: f32[256,32], index: 1, kind: input, shape index: {}]
  %s2 = inlined_call_operand.vmem [shape: f32[1,32], index: 2, kind: input, shape index: {}]
  %s3 = inlined_call_operand.vmem [shape: bf16[144,64], index: 3, kind: input, shape index: {}]
  %s4 = inlined_call_operand.vmem [shape: f32[512,64], index: 4, kind: input, shape index: {}]
  %s5 = inlined_call_operand.vmem [shape: f32[1,64], index: 5, kind: input, shape index: {}]
  %s6 = inlined_call_operand.vmem [shape: f32[576,64], index: 6, kind: input, shape index: {}]
  %s7 = inlined_call_operand.vmem [shape: f32[1,64], index: 7, kind: input, shape index: {}]
  %s8 = inlined_call_operand.vmem [shape: f32[64,1024], index: 8, kind: input, shape index: {}]
  %s9 = inlined_call_operand.vmem [shape: f32[1,1024], index: 9, kind: input, shape index: {}]
  %s10 = inlined_call_operand.vmem [shape: f32[1024,128], index: 10, kind: input, shape index: {}]
  %s11 = inlined_call_operand.vmem [shape: f32[1,128], index: 11, kind: input, shape index: {}]
  %s12 = inlined_call_operand.vmem [shape: f32[1,128], index: 12, kind: input, shape index: {}]
  %s13 = inlined_call_operand.hbm [shape: f32[2,1,128], index: 13, kind: output, shape index: {}]
  %s14 = sld [smem:[#allocation0]]
  $region85: #{dueling_dqn_forward.1} parent=0
    _
  %s16 = ssub.s32 1, %s14
  %s17 = scalar_select 0, %s16, %s14
  $region1: #{dueling_dqn_forward.1} parent=0
    #allocation4 [shape = 'u8[1024]{0}', space=vmem, size = 0x400, scoped, tag = 'output window, operand 0']
    #allocation5 [shape = 's32[2]{0}', space=sflag, size = 0x8, scoped, tag = 'scoped memory for dueling_dqn_forward.1']
    %18 = vsyncpa [#allocation5], 0
    %s19 = scalar_lea.sflag [#allocation5], 1
    %20 = vsyncpa %s19, 0
    loop: start=0, step=1, limit=4
    $region2: #{dueling_dqn_forward.1} parent=1 // loop_pre_header
      _
    $region3: #{dueling_dqn_forward.1} parent=1 // loop_header
      %s22 = sphi 0, %s26
      %p23 = scmp.ge.s32.totalorder %s22, 4
      %s32 = sphi 0, %s34
      %s35 = sphi 0, %s32
      %s36 = sphi 0, %s35
      %s52 = sphi 0, %s36
      %s56 = sphi 0, %s56
      %s58 = sphi 0, %s56
      %s59 = sphi 0, %s58
      %s73 = sphi 0, %s59
      %s77 = sphi 0, %s77
      %s79 = sphi 0, %s77
      %s80 = sphi 0, %s79
      %s94 = sphi 0, %s80
      %s98 = sphi 0, %s98
      %s100 = sphi 0, %s98
      %s101 = sphi 0, %s100
      %s115 = sphi 0, %s101
      %s119 = sphi 0, %s119
      %s121 = sphi 0, %s119
      %s122 = sphi 0, %s121
      %s136 = sphi 0, %s122
      %s140 = sphi 0, %s140
      %s142 = sphi 0, %s140
      %s143 = sphi 0, %s142
      %s157 = sphi 0, %s143
      %s161 = sphi 0, %s161
      %s163 = sphi 0, %s161
      %s164 = sphi 0, %s163
      %s178 = sphi 0, %s164
      %s182 = sphi 0, %s182
      %s184 = sphi 0, %s182
      %s185 = sphi 0, %s184
      %s199 = sphi 0, %s185
      %s203 = sphi 0, %s203
      %s205 = sphi 0, %s203
      %s206 = sphi 0, %s205
      %s220 = sphi 0, %s206
      %s224 = sphi 0, %s224
      %s226 = sphi 0, %s224
      %s227 = sphi 0, %s226
      %s241 = sphi 0, %s227
      %s245 = sphi 0, %s245
      %s247 = sphi 0, %s245
      %s248 = sphi 0, %s247
      %s262 = sphi 0, %s248
      %s266 = sphi 0, %s266
      %s268 = sphi 0, %s266
      %s269 = sphi 0, %s268
      %s283 = sphi 0, %s269
      %s287 = sphi 0, %s287
      %s289 = sphi 0, %s287
      %s290 = sphi 0, %s289
      %s304 = sphi 0, %s290
      %s310 = sphi 0, %s312
      %s313 = sphi 0, %s310
      %s314 = sphi 0, %s313
      %s330 = sphi 0, %s314
    $region4: #{dueling_dqn_forward.1} parent=1 // loop_header_branch
      %25 = sbr.rel (%p23) target = $region8
    $region5: #{dueling_dqn_forward.1} parent=1 // loop_body
      %s27 = ssub.s32 %s22, 1
      %s28 = ssub.s32 %s22, 2
      %s29 = sadd.s32 %s22, 1
      %s30 = ssub.s32 %s22, %s29
      %p31 = scmp.eq.s32.totalorder %s30, 0
      %s33 = sadd.s32 %s32, 1
      %s34 = scalar_select %p31, %s32, %s33
      %p37 = pneg %p31
      %p38 = scmp.eq.s32.totalorder %s22, 1
      %p39 = por %p37, %p38
      %p40 = scmp.ne.s32.totalorder %s32, %s35
      %p41 = scmp.eq.s32.totalorder %s22, 0
      %p42 = por %p40, %p41
      %p43 = scmp.ne.s32.totalorder %s32, %s35
      %p44 = scmp.eq.s32.totalorder %s27, 1
      %p45 = por %p43, %p44
      %p46 = scmp.ne.s32.totalorder %s35, %s36
      %p47 = scmp.eq.s32.totalorder %s27, 0
      %p48 = por %p46, %p47
      %p49 = scmp.ne.s32.totalorder %s35, %s36
      %p50 = scmp.eq.s32.totalorder %s28, 1
      %p51 = por %p49, %p50
      %p53 = scmp.ne.s32.totalorder %s36, %s52
      %p54 = scmp.eq.s32.totalorder %s28, 0
      %p55 = por %p53, %p54
      %s57 = sadd.s32 %s56, 1
      %p60 = scmp.eq.s32.totalorder %s22, 1
      %p61 = scmp.ne.s32.totalorder %s56, %s58
      %p62 = scmp.eq.s32.totalorder %s22, 0
      %p63 = por %p61, %p62
      %p64 = scmp.ne.s32.totalorder %s56, %s58
      %p65 = scmp.eq.s32.totalorder %s27, 1
      %p66 = por %p64, %p65
      %p67 = scmp.ne.s32.totalorder %s58, %s59
      %p68 = scmp.eq.s32.totalorder %s27, 0
      %p69 = por %p67, %p68
      %p70 = scmp.ne.s32.totalorder %s58, %s59
      %p71 = scmp.eq.s32.totalorder %s28, 1
      %p72 = por %p70, %p71
      %p74 = scmp.ne.s32.totalorder %s59, %s73
      %p75 = scmp.eq.s32.totalorder %s28, 0
      %p76 = por %p74, %p75
      %s78 = sadd.s32 %s77, 1
      %p81 = scmp.eq.s32.totalorder %s22, 1
      %p82 = scmp.ne.s32.totalorder %s77, %s79
      %p83 = scmp.eq.s32.totalorder %s22, 0
      %p84 = por %p82, %p83
      %p85 = scmp.ne.s32.totalorder %s77, %s79
      %p86 = scmp.eq.s32.totalorder %s27, 1
      %p87 = por %p85, %p86
      %p88 = scmp.ne.s32.totalorder %s79, %s80
      %p89 = scmp.eq.s32.totalorder %s27, 0
      %p90 = por %p88, %p89
      %p91 = scmp.ne.s32.totalorder %s79, %s80
      %p92 = scmp.eq.s32.totalorder %s28, 1
      %p93 = por %p91, %p92
      %p95 = scmp.ne.s32.totalorder %s80, %s94
      %p96 = scmp.eq.s32.totalorder %s28, 0
      %p97 = por %p95, %p96
      %s99 = sadd.s32 %s98, 1
      %p102 = scmp.eq.s32.totalorder %s22, 1
      %p103 = scmp.ne.s32.totalorder %s98, %s100
      %p104 = scmp.eq.s32.totalorder %s22, 0
      %p105 = por %p103, %p104
      %p106 = scmp.ne.s32.totalorder %s98, %s100
      %p107 = scmp.eq.s32.totalorder %s27, 1
      %p108 = por %p106, %p107
      %p109 = scmp.ne.s32.totalorder %s100, %s101
      %p110 = scmp.eq.s32.totalorder %s27, 0
      %p111 = por %p109, %p110
      %p112 = scmp.ne.s32.totalorder %s100, %s101
      %p113 = scmp.eq.s32.totalorder %s28, 1
      %p114 = por %p112, %p113
      %p116 = scmp.ne.s32.totalorder %s101, %s115
      %p117 = scmp.eq.s32.totalorder %s28, 0
      %p118 = por %p116, %p117
      %s120 = sadd.s32 %s119, 1
      %p123 = scmp.eq.s32.totalorder %s22, 1
      %p124 = scmp.ne.s32.totalorder %s119, %s121
      %p125 = scmp.eq.s32.totalorder %s22, 0
      %p126 = por %p124, %p125
      %p127 = scmp.ne.s32.totalorder %s119, %s121
      %p128 = scmp.eq.s32.totalorder %s27, 1
      %p129 = por %p127, %p128
      %p130 = scmp.ne.s32.totalorder %s121, %s122
      %p131 = scmp.eq.s32.totalorder %s27, 0
      %p132 = por %p130, %p131
      %p133 = scmp.ne.s32.totalorder %s121, %s122
      %p134 = scmp.eq.s32.totalorder %s28, 1
      %p135 = por %p133, %p134
      %p137 = scmp.ne.s32.totalorder %s122, %s136
      %p138 = scmp.eq.s32.totalorder %s28, 0
      %p139 = por %p137, %p138
      %s141 = sadd.s32 %s140, 1
      %p144 = scmp.eq.s32.totalorder %s22, 1
      %p145 = scmp.ne.s32.totalorder %s140, %s142
      %p146 = scmp.eq.s32.totalorder %s22, 0
      %p147 = por %p145, %p146
      %p148 = scmp.ne.s32.totalorder %s140, %s142
      %p149 = scmp.eq.s32.totalorder %s27, 1
      %p150 = por %p148, %p149
      %p151 = scmp.ne.s32.totalorder %s142, %s143
      %p152 = scmp.eq.s32.totalorder %s27, 0
      %p153 = por %p151, %p152
      %p154 = scmp.ne.s32.totalorder %s142, %s143
      %p155 = scmp.eq.s32.totalorder %s28, 1
      %p156 = por %p154, %p155
      %p158 = scmp.ne.s32.totalorder %s143, %s157
      %p159 = scmp.eq.s32.totalorder %s28, 0
      %p160 = por %p158, %p159
      %s162 = sadd.s32 %s161, 1
      %p165 = scmp.eq.s32.totalorder %s22, 1
      %p166 = scmp.ne.s32.totalorder %s161, %s163
      %p167 = scmp.eq.s32.totalorder %s22, 0
      %p168 = por %p166, %p167
      %p169 = scmp.ne.s32.totalorder %s161, %s163
      %p170 = scmp.eq.s32.totalorder %s27, 1
      %p171 = por %p169, %p170
      %p172 = scmp.ne.s32.totalorder %s163, %s164
      %p173 = scmp.eq.s32.totalorder %s27, 0
      %p174 = por %p172, %p173
      %p175 = scmp.ne.s32.totalorder %s163, %s164
      %p176 = scmp.eq.s32.totalorder %s28, 1
      %p177 = por %p175, %p176
      %p179 = scmp.ne.s32.totalorder %s164, %s178
      %p180 = scmp.eq.s32.totalorder %s28, 0
      %p181 = por %p179, %p180
      %s183 = sadd.s32 %s182, 1
      %p186 = scmp.eq.s32.totalorder %s22, 1
      %p187 = scmp.ne.s32.totalorder %s182, %s184
      %p188 = scmp.eq.s32.totalorder %s22, 0
      %p189 = por %p187, %p188
      %p190 = scmp.ne.s32.totalorder %s182, %s184
      %p191 = scmp.eq.s32.totalorder %s27, 1
      %p192 = por %p190, %p191
      %p193 = scmp.ne.s32.totalorder %s184, %s185
      %p194 = scmp.eq.s32.totalorder %s27, 0
      %p195 = por %p193, %p194
      %p196 = scmp.ne.s32.totalorder %s184, %s185
      %p197 = scmp.eq.s32.totalorder %s28, 1
      %p198 = por %p196, %p197
      %p200 = scmp.ne.s32.totalorder %s185, %s199
      %p201 = scmp.eq.s32.totalorder %s28, 0
      %p202 = por %p200, %p201
      %s204 = sadd.s32 %s203, 1
      %p207 = scmp.eq.s32.totalorder %s22, 1
      %p208 = scmp.ne.s32.totalorder %s203, %s205
      %p209 = scmp.eq.s32.totalorder %s22, 0
      %p210 = por %p208, %p209
      %p211 = scmp.ne.s32.totalorder %s203, %s205
      %p212 = scmp.eq.s32.totalorder %s27, 1
      %p213 = por %p211, %p212
      %p214 = scmp.ne.s32.totalorder %s205, %s206
      %p215 = scmp.eq.s32.totalorder %s27, 0
      %p216 = por %p214, %p215
      %p217 = scmp.ne.s32.totalorder %s205, %s206
      %p218 = scmp.eq.s32.totalorder %s28, 1
      %p219 = por %p217, %p218
      %p221 = scmp.ne.s32.totalorder %s206, %s220
      %p222 = scmp.eq.s32.totalorder %s28, 0
      %p223 = por %p221, %p222
      %s225 = sadd.s32 %s224, 1
      %p228 = scmp.eq.s32.totalorder %s22, 1
      %p229 = scmp.ne.s32.totalorder %s224, %s226
      %p230 = scmp.eq.s32.totalorder %s22, 0
      %p231 = por %p229, %p230
      %p232 = scmp.ne.s32.totalorder %s224, %s226
      %p233 = scmp.eq.s32.totalorder %s27, 1
      %p234 = por %p232, %p233
      %p235 = scmp.ne.s32.totalorder %s226, %s227
      %p236 = scmp.eq.s32.totalorder %s27, 0
      %p237 = por %p235, %p236
      %p238 = scmp.ne.s32.totalorder %s226, %s227
      %p239 = scmp.eq.s32.totalorder %s28, 1
      %p240 = por %p238, %p239
      %p242 = scmp.ne.s32.totalorder %s227, %s241
      %p243 = scmp.eq.s32.totalorder %s28, 0
      %p244 = por %p242, %p243
      %s246 = sadd.s32 %s245, 1
      %p249 = scmp.eq.s32.totalorder %s22, 1
      %p250 = scmp.ne.s32.totalorder %s245, %s247
      %p251 = scmp.eq.s32.totalorder %s22, 0
      %p252 = por %p250, %p251
      %p253 = scmp.ne.s32.totalorder %s245, %s247
      %p254 = scmp.eq.s32.totalorder %s27, 1
      %p255 = por %p253, %p254
      %p256 = scmp.ne.s32.totalorder %s247, %s248
      %p257 = scmp.eq.s32.totalorder %s27, 0
      %p258 = por %p256, %p257
      %p259 = scmp.ne.s32.totalorder %s247, %s248
      %p260 = scmp.eq.s32.totalorder %s28, 1
      %p261 = por %p259, %p260
      %p263 = scmp.ne.s32.totalorder %s248, %s262
      %p264 = scmp.eq.s32.totalorder %s28, 0
      %p265 = por %p263, %p264
      %s267 = sadd.s32 %s266, 1
      %p270 = scmp.eq.s32.totalorder %s22, 1
      %p271 = scmp.ne.s32.totalorder %s266, %s268
      %p272 = scmp.eq.s32.totalorder %s22, 0
      %p273 = por %p271, %p272
      %p274 = scmp.ne.s32.totalorder %s266, %s268
      %p275 = scmp.eq.s32.totalorder %s27, 1
      %p276 = por %p274, %p275
      %p277 = scmp.ne.s32.totalorder %s268, %s269
      %p278 = scmp.eq.s32.totalorder %s27, 0
      %p279 = por %p277, %p278
      %p280 = scmp.ne.s32.totalorder %s268, %s269
      %p281 = scmp.eq.s32.totalorder %s28, 1
      %p282 = por %p280, %p281
      %p284 = scmp.ne.s32.totalorder %s269, %s283
      %p285 = scmp.eq.s32.totalorder %s28, 0
      %p286 = por %p284, %p285
      %s288 = sadd.s32 %s287, 1
      %p291 = scmp.eq.s32.totalorder %s22, 1
      %p292 = scmp.ne.s32.totalorder %s287, %s289
      %p293 = scmp.eq.s32.totalorder %s22, 0
      %p294 = por %p292, %p293
      %p295 = scmp.ne.s32.totalorder %s287, %s289
      %p296 = scmp.eq.s32.totalorder %s27, 1
      %p297 = por %p295, %p296
      %p298 = scmp.ne.s32.totalorder %s289, %s290
      %p299 = scmp.eq.s32.totalorder %s27, 0
      %p300 = por %p298, %p299
      %p301 = scmp.ne.s32.totalorder %s289, %s290
      %p302 = scmp.eq.s32.totalorder %s28, 1
      %p303 = por %p301, %p302
      %p305 = scmp.ne.s32.totalorder %s290, %s304
      %p306 = scmp.eq.s32.totalorder %s28, 0
      %p307 = por %p305, %p306
      %s308 = ssub.s32 %s22, %s29
      %p309 = scmp.eq.s32.totalorder %s308, 0
      %s311 = sadd.s32 %s310, 1
      %s312 = scalar_select %p309, %s310, %s311
      %p315 = pneg %p309
      %p316 = scmp.eq.s32.totalorder %s22, 1
      %p317 = por %p315, %p316
      %p318 = scmp.ne.s32.totalorder %s310, %s313
      %p319 = scmp.eq.s32.totalorder %s22, 0
      %p320 = por %p318, %p319
      %p321 = scmp.ne.s32.totalorder %s310, %s313
      %p322 = scmp.eq.s32.totalorder %s27, 1
      %p323 = por %p321, %p322
      %p324 = scmp.ne.s32.totalorder %s313, %s314
      %p325 = scmp.eq.s32.totalorder %s27, 0
      %p326 = por %p324, %p325
      %p327 = scmp.ne.s32.totalorder %s313, %s314
      %p328 = scmp.eq.s32.totalorder %s28, 1
      %p329 = por %p327, %p328
      %p331 = scmp.ne.s32.totalorder %s314, %s330
      %p332 = scmp.eq.s32.totalorder %s28, 0
      %p333 = por %p331, %p332
      %p334 = scmp.le.s32.totalorder 1, %s22
      %p335 = scmp.lt.s32.totalorder %s22, 3
      %p336 = pnand %p334, %p335
      %p337 = pneg %p336
      // Predicated region
      $region9: #{dueling_dqn_forward.1} parent=5 // pred_check
        _
      $region10: #{dueling_dqn_forward.1} parent=5 // pred_check_branch
        %339 = sbr.rel (%p336) target = $region12
      $region11: #{dueling_dqn_forward.1} parent=5 // pred_region
        %s340 = ssub.s32 %s22, 1
        // Predicated region
        $region13: #{dueling_dqn_forward.1} parent=11 // pred_check
          %p341 = pneg %p69
        $region14: #{dueling_dqn_forward.1} parent=11 // pred_check_branch
          %343 = sbr.rel (%p341) target = $region16
        $region15: #{dueling_dqn_forward.1} parent=11 // pred_region
          _
        $region16: #{dueling_dqn_forward.1} parent=11 // pred_fallthru
          _
        // Predicated region
        $region17: #{dueling_dqn_forward.1} parent=11 // pred_check
          %p344 = pneg %p90
        $region18: #{dueling_dqn_forward.1} parent=11 // pred_check_branch
          %346 = sbr.rel (%p344) target = $region20
        $region19: #{dueling_dqn_forward.1} parent=11 // pred_region
          _
        $region20: #{dueling_dqn_forward.1} parent=11 // pred_fallthru
          _
        // Predicated region
        $region21: #{dueling_dqn_forward.1} parent=11 // pred_check
          %p347 = pneg %p111
        $region22: #{dueling_dqn_forward.1} parent=11 // pred_check_branch
          %349 = sbr.rel (%p347) target = $region24
        $region23: #{dueling_dqn_forward.1} parent=11 // pred_region
          _
        $region24: #{dueling_dqn_forward.1} parent=11 // pred_fallthru
          _
        // Predicated region
        $region25: #{dueling_dqn_forward.1} parent=11 // pred_check
          %p350 = pneg %p132
        $region26: #{dueling_dqn_forward.1} parent=11 // pred_check_branch
          %352 = sbr.rel (%p350) target = $region28
        $region27: #{dueling_dqn_forward.1} parent=11 // pred_region
          _
        $region28: #{dueling_dqn_forward.1} parent=11 // pred_fallthru
          _
        // Predicated region
        $region29: #{dueling_dqn_forward.1} parent=11 // pred_check
          %p353 = pneg %p153
        $region30: #{dueling_dqn_forward.1} parent=11 // pred_check_branch
          %355 = sbr.rel (%p353) target = $region32
        $region31: #{dueling_dqn_forward.1} parent=11 // pred_region
          _
        $region32: #{dueling_dqn_forward.1} parent=11 // pred_fallthru
          _
        // Predicated region
        $region33: #{dueling_dqn_forward.1} parent=11 // pred_check
          %p356 = pneg %p174
        $region34: #{dueling_dqn_forward.1} parent=11 // pred_check_branch
          %358 = sbr.rel (%p356) target = $region36
        $region35: #{dueling_dqn_forward.1} parent=11 // pred_region
          _
        $region36: #{dueling_dqn_forward.1} parent=11 // pred_fallthru
          _
        // Predicated region
        $region37: #{dueling_dqn_forward.1} parent=11 // pred_check
          %p359 = pneg %p195
        $region38: #{dueling_dqn_forward.1} parent=11 // pred_check_branch
          %361 = sbr.rel (%p359) target = $region40
        $region39: #{dueling_dqn_forward.1} parent=11 // pred_region
          _
        $region40: #{dueling_dqn_forward.1} parent=11 // pred_fallthru
          _
        // Predicated region
        $region41: #{dueling_dqn_forward.1} parent=11 // pred_check
          %p362 = pneg %p216
        $region42: #{dueling_dqn_forward.1} parent=11 // pred_check_branch
          %364 = sbr.rel (%p362) target = $region44
        $region43: #{dueling_dqn_forward.1} parent=11 // pred_region
          _
        $region44: #{dueling_dqn_forward.1} parent=11 // pred_fallthru
          _
        // Predicated region
        $region45: #{dueling_dqn_forward.1} parent=11 // pred_check
          %p365 = pneg %p237
        $region46: #{dueling_dqn_forward.1} parent=11 // pred_check_branch
          %367 = sbr.rel (%p365) target = $region48
        $region47: #{dueling_dqn_forward.1} parent=11 // pred_region
          _
        $region48: #{dueling_dqn_forward.1} parent=11 // pred_fallthru
          _
        // Predicated region
        $region49: #{dueling_dqn_forward.1} parent=11 // pred_check
          %p368 = pneg %p258
        $region50: #{dueling_dqn_forward.1} parent=11 // pred_check_branch
          %370 = sbr.rel (%p368) target = $region52
        $region51: #{dueling_dqn_forward.1} parent=11 // pred_region
          _
        $region52: #{dueling_dqn_forward.1} parent=11 // pred_fallthru
          _
        // Predicated region
        $region53: #{dueling_dqn_forward.1} parent=11 // pred_check
          %p371 = pneg %p279
        $region54: #{dueling_dqn_forward.1} parent=11 // pred_check_branch
          %373 = sbr.rel (%p371) target = $region56
        $region55: #{dueling_dqn_forward.1} parent=11 // pred_region
          _
        $region56: #{dueling_dqn_forward.1} parent=11 // pred_fallthru
          _
        // Predicated region
        $region57: #{dueling_dqn_forward.1} parent=11 // pred_check
          %p374 = pneg %p300
        $region58: #{dueling_dqn_forward.1} parent=11 // pred_check_branch
          %376 = sbr.rel (%p374) target = $region60
        $region59: #{dueling_dqn_forward.1} parent=11 // pred_region
          _
        $region60: #{dueling_dqn_forward.1} parent=11 // pred_fallthru
          _
      $region12: #{dueling_dqn_forward.1} parent=5 // pred_fallthru
        _
      %p377 = scmp.lt.s32.totalorder %s22, 2
      // Predicated region
      $region61: #{dueling_dqn_forward.1} parent=5 // pred_check
        %p378 = pneg %p377
      $region62: #{dueling_dqn_forward.1} parent=5 // pred_check_branch
        %380 = sbr.rel (%p378) target = $region64
      $region63: #{dueling_dqn_forward.1} parent=5 // pred_region
        // Predicated region
        $region65: #{dueling_dqn_forward.1} parent=63 // pred_check
          %p381 = pneg %p42
        $region66: #{dueling_dqn_forward.1} parent=63 // pred_check_branch
          %383 = sbr.rel (%p381) target = $region68
        $region67: #{dueling_dqn_forward.1} parent=63 // pred_region
          %p384 = scmp.lt.s32.totalorder %s22, 1
          %s385 = scalar_select %p384, %s22, 1
          %s386 = smul.addr %s385, 16
          %s387 = smul.addr %s386, 4
          %s388 = scalar_lea.vmem %s0, %s387
        $region68: #{dueling_dqn_forward.1} parent=63 // pred_fallthru
          _
      $region64: #{dueling_dqn_forward.1} parent=5 // pred_fallthru
        _
      %p389 = scmp.le.s32.totalorder 1, %s22
      %p390 = scmp.lt.s32.totalorder %s22, 3
      %p391 = pnand %p389, %p390
      %p392 = pneg %p391
      // Predicated region
      $region69: #{dueling_dqn_forward.1} parent=5 // pred_check
        _
      $region70: #{dueling_dqn_forward.1} parent=5 // pred_check_branch
        %394 = sbr.rel (%p391) target = $region72
      $region71: #{dueling_dqn_forward.1} parent=5 // pred_region
        %s395 = ssub.s32 %s22, 1
        %p396 = scmp.lt.s32.totalorder %s27, 1
        %s397 = scalar_select %p396, %s27, 1
        %s398 = smul.addr %s397, 16
        %s399 = smul.addr %s398, 4
        %s400 = scalar_lea.vmem %s0, %s399
        %p401 = pneg %p48
        %p402 = pneg %p45
        %p403 = pneg %p69
        %p404 = pneg %p66
        %p405 = pneg %p90
        %p406 = pneg %p87
        %p407 = pneg %p111
        %p408 = pneg %p108
        %p409 = pneg %p132
        %p410 = pneg %p129
        %p411 = pneg %p153
        %p412 = pneg %p150
        %p413 = pneg %p174
        %p414 = pneg %p171
        %p415 = pneg %p195
        %p416 = pneg %p192
        %p417 = pneg %p216
        %p418 = pneg %p213
        %p419 = pneg %p237
        %p420 = pneg %p234
        %p421 = pneg %p258
        %p422 = pneg %p255
        %p423 = pneg %p279
        %p424 = pneg %p276
        %p425 = pneg %p300
        %p426 = pneg %p297
        %p427 = pneg %p326
        %p428 = pneg %p323
        %s429 = sand.u32 %s313, 1
        %s430 = scalar_lea.sflag [#allocation5], %s429
        %s431 = sand.u32 %s313, 1
        %s432 = scalar_lea.vmem [#allocation4], %s431
        %p433 = scmp.lt.s32.totalorder %s27, 1
        %s434 = scalar_select %p433, %s27, 1
        %s435 = smul.addr %s434, 16
        %s436 = smul.addr %s435, 4
        %s437 = scalar_lea.vmem %s0, %s436
        %v438 = vld [vmem:[%s437] sm:$0xff]
        %v439 = vld [vmem:[%s437 + $0x8] sm:$0xff]
        %v440 = vld [vmem:[%s437 + $0x10] sm:$0xff]
        %v441 = vld [vmem:[%s437 + $0x18] sm:$0xff]
        %v442 = vld [vmem:[%s437 + $0x20] sm:$0xff]
        %v443 = vld [vmem:[%s437 + $0x28] sm:$0xff]
        %v444 = vld [vmem:[%s437 + $0x30] sm:$0xff]
        %v445 = vld [vmem:[%s437 + $0x38] sm:$0xff]
        %v446 = vunpack.c.l.bf16 %v438
        %v447 = vunpack.c.h.bf16 %v438
        %v448 = vunpack.c.l.bf16 %v439
        %v449 = vunpack.c.h.bf16 %v439
        %v450 = vunpack.c.l.bf16 %v440
        %v451 = vunpack.c.h.bf16 %v440
        %v452 = vunpack.c.l.bf16 %v441
        %v453 = vunpack.c.h.bf16 %v441
        %v454 = vunpack.c.l.bf16 %v442
        %v455 = vunpack.c.h.bf16 %v442
        %v456 = vunpack.c.l.bf16 %v443
        %v457 = vunpack.c.h.bf16 %v443
        %v458 = vunpack.c.l.bf16 %v444
        %v459 = vunpack.c.h.bf16 %v444
        %v460 = vunpack.c.l.bf16 %v445
        %v461 = vunpack.c.h.bf16 %v445
        %v462 = vld [vmem:[%s1] sm:$0xff]
        %v463 = vld [vmem:[%s1 + $0x8] sm:$0xff]
        %v464 = vld [vmem:[%s1 + $0x10] sm:$0xff]
        %v465 = vld [vmem:[%s1 + $0x18] sm:$0xff]
        %v466 = vld [vmem:[%s1 + $0x20] sm:$0xff]
        %v467 = vld [vmem:[%s1 + $0x28] sm:$0xff]
        %v468 = vld [vmem:[%s1 + $0x30] sm:$0xff]
        %v469 = vld [vmem:[%s1 + $0x38] sm:$0xff]
        %v470 = vld [vmem:[%s1 + $0x40] sm:$0xff]
        %v471 = vld [vmem:[%s1 + $0x48] sm:$0xff]
        %v472 = vld [vmem:[%s1 + $0x50] sm:$0xff]
        %v473 = vld [vmem:[%s1 + $0x58] sm:$0xff]
        %v474 = vld [vmem:[%s1 + $0x60] sm:$0xff]
        %v475 = vld [vmem:[%s1 + $0x68] sm:$0xff]
        %v476 = vld [vmem:[%s1 + $0x70] sm:$0xff]
        %v477 = vld [vmem:[%s1 + $0x78] sm:$0xff]
        %v478 = vld [vmem:[%s1 + $0x80] sm:$0xff]
        %v479 = vld [vmem:[%s1 + $0x88] sm:$0xff]
        %v480 = vld [vmem:[%s1 + $0x90] sm:$0xff]
        %v481 = vld [vmem:[%s1 + $0x98] sm:$0xff]
        %v482 = vld [vmem:[%s1 + $0xa0] sm:$0xff]
        %v483 = vld [vmem:[%s1 + $0xa8] sm:$0xff]
        %v484 = vld [vmem:[%s1 + $0xb0] sm:$0xff]
        %v485 = vld [vmem:[%s1 + $0xb8] sm:$0xff]
        %v486 = vld [vmem:[%s1 + $0xc0] sm:$0xff]
        %v487 = vld [vmem:[%s1 + $0xc8] sm:$0xff]
        %v488 = vld [vmem:[%s1 + $0xd0] sm:$0xff]
        %v489 = vld [vmem:[%s1 + $0xd8] sm:$0xff]
        %v490 = vld [vmem:[%s1 + $0xe0] sm:$0xff]
        %v491 = vld [vmem:[%s1 + $0xe8] sm:$0xff]
        %v492 = vld [vmem:[%s1 + $0xf0] sm:$0xff]
        %v493 = vld [vmem:[%s1 + $0xf8] sm:$0xff]
        %v494 = vld [vmem:[%s2] sm:$0x1]
        %v496 = vlaneseq
        %v497 = vshrl.u32 %v496, 7
        %v498 = vsub.s32 0, %v497
        %v499 = vrot.slane %v494, %v498
        %501 = vmatprep.subr.mxu0 0.0
        %502 = vmatpush1.msra.mxu0 %v477
        %503 = vmatprep.subr.mxu0 0.0
        %504 = vmatpush1.msra.mxu0 %v476
        %505 = vmatprep.subr.mxu0 0.0
        %506 = vmatpush1.msra.mxu0 %v475
        %507 = vmatprep.subr.mxu0 0.0
        %508 = vmatpush1.msra.mxu0 %v474
        %509 = vmatprep.subr.mxu0 0.0
        %510 = vmatpush1.msra.mxu0 %v473
        %511 = vmatprep.subr.mxu0 0.0
        %512 = vmatpush1.msra.mxu0 %v472
        %513 = vmatprep.subr.mxu0 0.0
        %514 = vmatpush1.msra.mxu0 %v471
        %515 = vmatprep.subr.mxu0 0.0
        %516 = vmatpush1.msra.mxu0 %v470
        %517 = vmatprep.subr.mxu0 0.0
        %518 = vmatpush1.msra.mxu0 %v469
        %519 = vmatprep.subr.mxu0 0.0
        %520 = vmatpush1.msra.mxu0 %v468
        %521 = vmatprep.subr.mxu0 0.0
        %522 = vmatpush1.msra.mxu0 %v467
        %523 = vmatprep.subr.mxu0 0.0
        %524 = vmatpush1.msra.mxu0 %v466
        %525 = vmatprep.subr.mxu0 0.0
        %526 = vmatpush1.msra.mxu0 %v465
        %527 = vmatprep.subr.mxu0 0.0
        %528 = vmatpush1.msra.mxu0 %v464
        %529 = vmatprep.subr.mxu0 0.0
        %530 = vmatpush1.msra.mxu0 %v463
        %531 = vmatprep.subr.mxu0 0.0
        %532 = vmatpush1.msra.mxu0 %v462
        %533 = vmatprep.subr.mxu0 0.0
        %534 = vmatpush2.msra.mxu0 %v493
        %535 = vmatprep.subr.mxu0 0.0
        %536 = vmatpush2.msra.mxu0 %v492
        %537 = vmatprep.subr.mxu0 0.0
        %538 = vmatpush2.msra.mxu0 %v491
        %539 = vmatprep.subr.mxu0 0.0
        %540 = vmatpush2.msra.mxu0 %v490
        %541 = vmatprep.subr.mxu0 0.0
        %542 = vmatpush2.msra.mxu0 %v489
        %543 = vmatprep.subr.mxu0 0.0
        %544 = vmatpush2.msra.mxu0 %v488
        %545 = vmatprep.subr.mxu0 0.0
        %546 = vmatpush2.msra.mxu0 %v487
        %547 = vmatprep.subr.mxu0 0.0
        %548 = vmatpush2.msra.mxu0 %v486
        %549 = vmatprep.subr.mxu0 0.0
        %550 = vmatpush2.msra.mxu0 %v485
        %551 = vmatprep.subr.mxu0 0.0
        %552 = vmatpush2.msra.mxu0 %v484
        %553 = vmatprep.subr.mxu0 0.0
        %554 = vmatpush2.msra.mxu0 %v483
        %555 = vmatprep.subr.mxu0 0.0
        %556 = vmatpush2.msra.mxu0 %v482
        %557 = vmatprep.subr.mxu0 0.0
        %558 = vmatpush2.msra.mxu0 %v481
        %559 = vmatprep.subr.mxu0 0.0
        %560 = vmatpush2.msra.mxu0 %v480
        %561 = vmatprep.subr.mxu0 0.0
        %562 = vmatpush2.msra.mxu0 %v479
        %563 = vmatprep.subr.mxu0 0.0
        %564 = vmatpush2.msra.mxu0 %v478
        %565 = vmatprep.mubr.f32.mxu0 %v447
        %566 = vmatmul.mubr.f32.gmra.mxu0 %v446
        %v567 = vpop.f32.mrf.mxu0
        %v568 = vadd.f32 %v499, %v567
        %v569 = vpop.f32.mrf.mxu0
        %570 = vmatprep.mubr.f32.mxu0 %v449
        %571 = vmatmul.mubr.f32.gmra.mxu0 %v448
        %v572 = vpop.f32.mrf.mxu0
        %v573 = vadd.f32 %v499, %v572
        %v574 = vpop.f32.mrf.mxu0
        %575 = vmatprep.mubr.f32.mxu0 %v451
        %576 = vmatmul.mubr.f32.gmra.mxu0 %v450
        %v577 = vpop.f32.mrf.mxu0
        %v578 = vadd.f32 %v499, %v577
        %v579 = vpop.f32.mrf.mxu0
        %580 = vmatprep.mubr.f32.mxu0 %v453
        %581 = vmatmul.mubr.f32.gmra.mxu0 %v452
        %v582 = vpop.f32.mrf.mxu0
        %v583 = vadd.f32 %v499, %v582
        %v584 = vpop.f32.mrf.mxu0
        %585 = vmatprep.mubr.f32.mxu0 %v455
        %586 = vmatmul.mubr.f32.gmra.mxu0 %v454
        %v587 = vpop.f32.mrf.mxu0
        %v588 = vadd.f32 %v499, %v587
        %v589 = vpop.f32.mrf.mxu0
        %590 = vmatprep.mubr.f32.mxu0 %v457
        %591 = vmatmul.mubr.f32.gmra.mxu0 %v456
        %v592 = vpop.f32.mrf.mxu0
        %v593 = vadd.f32 %v499, %v592
        %v594 = vpop.f32.mrf.mxu0
        %595 = vmatprep.mubr.f32.mxu0 %v459
        %596 = vmatmul.mubr.f32.gmra.mxu0 %v458
        %v597 = vpop.f32.mrf.mxu0
        %v598 = vadd.f32 %v499, %v597
        %v599 = vpop.f32.mrf.mxu0
        %600 = vmatprep.mubr.f32.mxu0 %v461
        %601 = vmatmul.mubr.f32.gmra.mxu0 %v460
        %v602 = vpop.f32.mrf.mxu0
        %v603 = vadd.f32 %v499, %v602
        %v604 = vpop.f32.mrf.mxu0
        %605 = vdwg.mxu0
        %v606 = vmax.f32 %v568, 0.0
        %v607 = vmax.f32 %v573, 0.0
        %v608 = vmax.f32 %v578, 0.0
        %v609 = vmax.f32 %v583, 0.0
        %v610 = vmax.f32 %v588, 0.0
        %v611 = vmax.f32 %v593, 0.0
        %v612 = vmax.f32 %v598, 0.0
        %v613 = vmax.f32 %v603, 0.0
        %v614 = vld [vmem:[%s3] sm:$0xf]
        %v615 = vld [vmem:[%s3 + $0x4] sm:$0xf]
        %v616 = vld [vmem:[%s3 + $0x8] sm:$0xf]
        %v617 = vld [vmem:[%s3 + $0xc] sm:$0xf]
        %v618 = vld [vmem:[%s3 + $0x10] sm:$0xf]
        %v619 = vld [vmem:[%s3 + $0x14] sm:$0xf]
        %v620 = vld [vmem:[%s3 + $0x18] sm:$0xf]
        %v621 = vld [vmem:[%s3 + $0x1c] sm:$0xf]
        %v622 = vld [vmem:[%s3 + $0x20] sm:$0xf]
        %v623 = vld [vmem:[%s3 + $0x24] sm:$0xf]
        %v624 = vld [vmem:[%s3 + $0x28] sm:$0xf]
        %v625 = vld [vmem:[%s3 + $0x2c] sm:$0xf]
        %v626 = vld [vmem:[%s3 + $0x30] sm:$0xf]
        %v627 = vld [vmem:[%s3 + $0x34] sm:$0xf]
        %v628 = vld [vmem:[%s3 + $0x38] sm:$0xf]
        %v629 = vld [vmem:[%s3 + $0x3c] sm:$0xf]
        %v630 = vld [vmem:[%s3 + $0x40] sm:$0xf]
        %v631 = vld [vmem:[%s3 + $0x44] sm:$0xf]
        %v632 = vunpack.c.l.bf16 %v614
        %v633 = vunpack.c.l.bf16 %v615
        %v634 = vunpack.c.l.bf16 %v616
        %v635 = vunpack.c.l.bf16 %v617
        %v636 = vunpack.c.l.bf16 %v618
        %v637 = vunpack.c.l.bf16 %v619
        %v638 = vunpack.c.l.bf16 %v620
        %v639 = vunpack.c.l.bf16 %v621
        %v640 = vunpack.c.l.bf16 %v622
        %v641 = vunpack.c.l.bf16 %v623
        %v642 = vunpack.c.l.bf16 %v624
        %v643 = vunpack.c.l.bf16 %v625
        %v644 = vunpack.c.l.bf16 %v626
        %v645 = vunpack.c.l.bf16 %v627
        %v646 = vunpack.c.l.bf16 %v628
        %v647 = vunpack.c.l.bf16 %v629
        %v648 = vunpack.c.l.bf16 %v630
        %v649 = vunpack.c.l.bf16 %v631
        %vm650 = vcmask 523264
        %v652 = vsel %vm650, %v632, 0
        %v655 = vsel %vm650, %v633, 0
        %v658 = vsel %vm650, %v634, 0
        %v661 = vsel %vm650, %v635, 0
        %v664 = vsel %vm650, %v636, 0
        %v667 = vsel %vm650, %v637, 0
        %v670 = vsel %vm650, %v638, 0
        %v673 = vsel %vm650, %v639, 0
        %v676 = vsel %vm650, %v640, 0
        %v679 = vsel %vm650, %v641, 0
        %v682 = vsel %vm650, %v642, 0
        %v685 = vsel %vm650, %v643, 0
        %v688 = vsel %vm650, %v644, 0
        %v691 = vsel %vm650, %v645, 0
        %v694 = vsel %vm650, %v646, 0
        %v697 = vsel %vm650, %v647, 0
        %v700 = vsel %vm650, %v648, 0
        %v703 = vsel %vm650, %v649, 0
        %705 = vmatprep.subr.mxu0 0.0
        %706 = vmatpush1.msra.mxu0 0.0
        %707 = vmatprep.subr.mxu0 0.0
        %708 = vmatpush1.msra.mxu0 0.0
        %709 = vmatprep.subr.mxu0 0.0
        %710 = vmatpush1.msra.mxu0 0.0
        %711 = vmatprep.subr.mxu0 0.0
        %712 = vmatpush1.msra.mxu0 0.0
        %713 = vmatprep.subr.mxu0 0.0
        %714 = vmatpush1.msra.mxu0 0.0
        %715 = vmatprep.subr.mxu0 0.0
        %716 = vmatpush1.msra.mxu0 0.0
        %717 = vmatprep.subr.mxu0 0.0
        %718 = vmatpush1.msra.mxu0 0.0
        %719 = vmatprep.subr.mxu0 0.0
        %720 = vmatpush1.msra.mxu0 0.0
        %721 = vmatprep.subr.mxu0 0.0
        %722 = vmatpush1.msra.mxu0 %v613
        %723 = vmatprep.subr.mxu0 0.0
        %724 = vmatpush1.msra.mxu0 %v612
        %725 = vmatprep.subr.mxu0 0.0
        %726 = vmatpush1.msra.mxu0 %v611
        %727 = vmatprep.subr.mxu0 0.0
        %728 = vmatpush1.msra.mxu0 %v610
        %729 = vmatprep.subr.mxu0 0.0
        %730 = vmatpush1.msra.mxu0 %v609
        %731 = vmatprep.subr.mxu0 0.0
        %732 = vmatpush1.msra.mxu0 %v608
        %733 = vmatprep.subr.mxu0 0.0
        %734 = vmatpush1.msra.mxu0 %v607
        %735 = vmatprep.subr.mxu0 0.0
        %736 = vmatpush1.msra.mxu0 %v606
        %737 = vmatprep.subr.mxu0 0.0
        %738 = vmatpush2.msra.mxu0 0.0
        %739 = vmatprep.subr.mxu0 0.0
        %740 = vmatpush2.msra.mxu0 0.0
        %741 = vmatprep.subr.mxu0 0.0
        %742 = vmatpush2.msra.mxu0 0.0
        %743 = vmatprep.subr.mxu0 0.0
        %744 = vmatpush2.msra.mxu0 0.0
        %745 = vmatprep.subr.mxu0 0.0
        %746 = vmatpush2.msra.mxu0 0.0
        %747 = vmatprep.subr.mxu0 0.0
        %748 = vmatpush2.msra.mxu0 0.0
        %749 = vmatprep.subr.mxu0 0.0
        %750 = vmatpush2.msra.mxu0 0.0
        %751 = vmatprep.subr.mxu0 0.0
        %752 = vmatpush2.msra.mxu0 0.0
        %753 = vmatprep.subr.mxu0 0.0
        %754 = vmatpush2.msra.mxu0 0.0
        %755 = vmatprep.subr.mxu0 0.0
        %756 = vmatpush2.msra.mxu0 0.0
        %757 = vmatprep.subr.mxu0 0.0
        %758 = vmatpush2.msra.mxu0 0.0
        %759 = vmatprep.subr.mxu0 0.0
        %760 = vmatpush2.msra.mxu0 0.0
        %761 = vmatprep.subr.mxu0 0.0
        %762 = vmatpush2.msra.mxu0 0.0
        %763 = vmatprep.subr.mxu0 0.0
        %764 = vmatpush2.msra.mxu0 0.0
        %765 = vmatprep.subr.mxu0 0.0
        %766 = vmatpush2.msra.mxu0 0.0
        %767 = vmatprep.subr.mxu0 0.0
        %768 = vmatpush2.msra.mxu0 0.0
        %769 = vmatprep.mubr.f32.mxu0 0.0
        %770 = vmatmul.mubr.f32.gmra.mxu0 %v652
        %v771 = vpop.f32.mrf.mxu0
        %v772 = vadd.f32 0.0, %v771
        %v773 = vpop.f32.mrf.mxu0
        %774 = vmatprep.mubr.f32.mxu0 0.0
        %775 = vmatmul.mubr.f32.gmra.mxu0 %v655
        %v776 = vpop.f32.mrf.mxu0
        %v777 = vadd.f32 0.0, %v776
        %v778 = vpop.f32.mrf.mxu0
        %779 = vmatprep.mubr.f32.mxu0 0.0
        %780 = vmatmul.mubr.f32.gmra.mxu0 %v658
        %v781 = vpop.f32.mrf.mxu0
        %v782 = vadd.f32 0.0, %v781
        %v783 = vpop.f32.mrf.mxu0
        %784 = vmatprep.mubr.f32.mxu0 0.0
        %785 = vmatmul.mubr.f32.gmra.mxu0 %v661
        %v786 = vpop.f32.mrf.mxu0
        %v787 = vadd.f32 0.0, %v786
        %v788 = vpop.f32.mrf.mxu0
        %789 = vmatprep.mubr.f32.mxu0 0.0
        %790 = vmatmul.mubr.f32.gmra.mxu0 %v664
        %v791 = vpop.f32.mrf.mxu0
        %v792 = vadd.f32 0.0, %v791
        %v793 = vpop.f32.mrf.mxu0
        %794 = vmatprep.mubr.f32.mxu0 0.0
        %795 = vmatmul.mubr.f32.gmra.mxu0 %v667
        %v796 = vpop.f32.mrf.mxu0
        %v797 = vadd.f32 0.0, %v796
        %v798 = vpop.f32.mrf.mxu0
        %799 = vmatprep.mubr.f32.mxu0 0.0
        %800 = vmatmul.mubr.f32.gmra.mxu0 %v670
        %v801 = vpop.f32.mrf.mxu0
        %v802 = vadd.f32 0.0, %v801
        %v803 = vpop.f32.mrf.mxu0
        %804 = vmatprep.mubr.f32.mxu0 0.0
        %805 = vmatmul.mubr.f32.gmra.mxu0 %v673
        %v806 = vpop.f32.mrf.mxu0
        %v807 = vadd.f32 0.0, %v806
        %v808 = vpop.f32.mrf.mxu0
        %809 = vmatprep.mubr.f32.mxu0 0.0
        %810 = vmatmul.mubr.f32.gmra.mxu0 %v676
        %v811 = vpop.f32.mrf.mxu0
        %v812 = vadd.f32 0.0, %v811
        %v813 = vpop.f32.mrf.mxu0
        %814 = vmatprep.mubr.f32.mxu0 0.0
        %815 = vmatmul.mubr.f32.gmra.mxu0 %v679
        %v816 = vpop.f32.mrf.mxu0
        %v817 = vadd.f32 0.0, %v816
        %v818 = vpop.f32.mrf.mxu0
        %819 = vmatprep.mubr.f32.mxu0 0.0
        %820 = vmatmul.mubr.f32.gmra.mxu0 %v682
        %v821 = vpop.f32.mrf.mxu0
        %v822 = vadd.f32 0.0, %v821
        %v823 = vpop.f32.mrf.mxu0
        %824 = vmatprep.mubr.f32.mxu0 0.0
        %825 = vmatmul.mubr.f32.gmra.mxu0 %v685
        %v826 = vpop.f32.mrf.mxu0
        %v827 = vadd.f32 0.0, %v826
        %v828 = vpop.f32.mrf.mxu0
        %829 = vmatprep.mubr.f32.mxu0 0.0
        %830 = vmatmul.mubr.f32.gmra.mxu0 %v688
        %v831 = vpop.f32.mrf.mxu0
        %v832 = vadd.f32 0.0, %v831
        %v833 = vpop.f32.mrf.mxu0
        %834 = vmatprep.mubr.f32.mxu0 0.0
        %835 = vmatmul.mubr.f32.gmra.mxu0 %v691
        %v836 = vpop.f32.mrf.mxu0
        %v837 = vadd.f32 0.0, %v836
        %v838 = vpop.f32.mrf.mxu0
        %839 = vmatprep.mubr.f32.mxu0 0.0
        %840 = vmatmul.mubr.f32.gmra.mxu0 %v694
        %v841 = vpop.f32.mrf.mxu0
        %v842 = vadd.f32 0.0, %v841
        %v843 = vpop.f32.mrf.mxu0
        %844 = vmatprep.mubr.f32.mxu0 0.0
        %845 = vmatmul.mubr.f32.gmra.mxu0 %v697
        %v846 = vpop.f32.mrf.mxu0
        %v847 = vadd.f32 0.0, %v846
        %v848 = vpop.f32.mrf.mxu0
        %849 = vmatprep.mubr.f32.mxu0 0.0
        %850 = vmatmul.mubr.f32.gmra.mxu0 %v700
        %v851 = vpop.f32.mrf.mxu0
        %v852 = vadd.f32 0.0, %v851
        %v853 = vpop.f32.mrf.mxu0
        %854 = vmatprep.mubr.f32.mxu0 0.0
        %855 = vmatmul.mubr.f32.gmra.mxu0 %v703
        %v856 = vpop.f32.mrf.mxu0
        %v857 = vadd.f32 0.0, %v856
        %v858 = vpop.f32.mrf.mxu0
        %859 = vdwg.mxu0
        %vm860 = vcmask 261120
        %861 = vst.msk [vmem:[#allocation2] sm:$0xff] %vm860, %v772
        %vm862 = vcmask 253952
        %863 = vst.msk [vmem:[#allocation2 + $0x20] sm:$0x1] %vm862, %v777
        %vm866 = vcmask 1046528
        %v867 = vrot.slane %v777, 1
        %v868 = vrot.slane %v782, 1
        %v869 = vsel %vm866, %v867, %v868
        %870 = vrot.lane.b32.xlu0 %v869, 32
        %v871 = vpop.permute.xlu0 %870
        %872 = vrot.lane.b32.xlu0 %v868, 32
        %v873 = vpop.permute.xlu0 %872
        %vm876 = vcmask 523520
        %877 = vst.msk [vmem:[#allocation2] sm:$0xff] %vm876, %v871
        %vm878 = vcmask 516352
        %879 = vst.msk [vmem:[#allocation2 + $0x20] sm:$0x1] %vm878, %v873
        %vm881 = vcmask 1045504
        %v882 = vrot.slane %v782, 2
        %v883 = vrot.slane %v787, 2
        %v884 = vsel %vm881, %v882, %v883
        %885 = vrot.lane.b32.xlu0 %v884, 64
        %v886 = vpop.permute.xlu0 %885
        %887 = vrot.lane.b32.xlu0 %v883, 64
        %v888 = vpop.permute.xlu0 %887
        %vm891 = vcmask 785920
        %892 = vst.msk [vmem:[#allocation2] sm:$0xff] %vm891, %v886
        %vm893 = vcmask 778752
        %894 = vst.msk [vmem:[#allocation2 + $0x20] sm:$0x1] %vm893, %v888
        %vm896 = vcmask 1044480
        %v897 = vrot.slane %v787, 3
        %v898 = vrot.slane %v792, 3
        %v899 = vsel %vm896, %v897, %v898
        %900 = vrot.lane.b32.xlu0 %v899, 96
        %v901 = vpop.permute.xlu0 %900
        %902 = vrot.lane.b32.xlu0 %v898, 96
        %v903 = vpop.permute.xlu0 %902
        %vm906 = vcmask 1048320
        %907 = vst.msk [vmem:[#allocation2] sm:$0xff] %vm906, %v901
        %vm908 = vcmask 1041152
        %909 = vst.msk [vmem:[#allocation2 + $0x20] sm:$0x1] %vm908, %v903
        %vm911 = vcmask 1043456
        %v912 = vrot.slane %v792, 4
        %v913 = vrot.slane %v797, 4
        %v914 = vsel %vm911, %v912, %v913
        %917 = vst.msk [vmem:[#allocation2 + $0x8] sm:$0xff] %vm860, %v914
        %918 = vst.msk [vmem:[#allocation2 + $0x28] sm:$0x1] %vm862, %v913
        %vm920 = vcmask 1042432
        %v921 = vrot.slane %v797, 5
        %v922 = vrot.slane %v802, 5
        %v923 = vsel %vm920, %v921, %v922
        %924 = vrot.lane.b32.xlu0 %v923, 32
        %v925 = vpop.permute.xlu0 %924
        %926 = vrot.lane.b32.xlu0 %v922, 32
        %v927 = vpop.permute.xlu0 %926
        %930 = vst.msk [vmem:[#allocation2 + $0x8] sm:$0xff] %vm876, %v925
        %931 = vst.msk [vmem:[#allocation2 + $0x28] sm:$0x1] %vm878, %v927
        %vm933 = vcmask 1041408
        %v934 = vrot.slane %v802, 6
        %v935 = vrot.slane %v807, 6
        %v936 = vsel %vm933, %v934, %v935
        %937 = vrot.lane.b32.xlu0 %v936, 64
        %v938 = vpop.permute.xlu0 %937
        %939 = vrot.lane.b32.xlu0 %v935, 64
        %v940 = vpop.permute.xlu0 %939
        %943 = vst.msk [vmem:[#allocation2 + $0x8] sm:$0xff] %vm891, %v938
        %944 = vst.msk [vmem:[#allocation2 + $0x28] sm:$0x1] %vm893, %v940
        %vm946 = vcmask 1040384
        %v947 = vrot.slane %v807, 7
        %v948 = vrot.slane %v812, 7
        %v949 = vsel %vm946, %v947, %v948
        %950 = vrot.lane.b32.xlu0 %v949, 96
        %v951 = vpop.permute.xlu0 %950
        %952 = vrot.lane.b32.xlu0 %v948, 96
        %v953 = vpop.permute.xlu0 %952
        %956 = vst.msk [vmem:[#allocation2 + $0x8] sm:$0xff] %vm906, %v951
        %957 = vst.msk [vmem:[#allocation2 + $0x28] sm:$0x1] %vm908, %v953
        %958 = vst.msk [vmem:[#allocation2 + $0x10] sm:$0xff] %vm860, %v817
        %959 = vst.msk [vmem:[#allocation2 + $0x30] sm:$0x1] %vm862, %v822
        %v962 = vrot.slane %v822, 1
        %v963 = vrot.slane %v827, 1
        %v964 = vsel %vm866, %v962, %v963
        %965 = vrot.lane.b32.xlu0 %v964, 32
        %v966 = vpop.permute.xlu0 %965
        %967 = vrot.lane.b32.xlu0 %v963, 32
        %v968 = vpop.permute.xlu0 %967
        %971 = vst.msk [vmem:[#allocation2 + $0x10] sm:$0xff] %vm876, %v966
        %972 = vst.msk [vmem:[#allocation2 + $0x30] sm:$0x1] %vm878, %v968
        %v974 = vrot.slane %v827, 2
        %v975 = vrot.slane %v832, 2
        %v976 = vsel %vm881, %v974, %v975
        %977 = vrot.lane.b32.xlu0 %v976, 64
        %v978 = vpop.permute.xlu0 %977
        %979 = vrot.lane.b32.xlu0 %v975, 64
        %v980 = vpop.permute.xlu0 %979
        %983 = vst.msk [vmem:[#allocation2 + $0x10] sm:$0xff] %vm891, %v978
        %984 = vst.msk [vmem:[#allocation2 + $0x30] sm:$0x1] %vm893, %v980
        %v986 = vrot.slane %v832, 3
        %v987 = vrot.slane %v837, 3
        %v988 = vsel %vm896, %v986, %v987
        %989 = vrot.lane.b32.xlu0 %v988, 96
        %v990 = vpop.permute.xlu0 %989
        %991 = vrot.lane.b32.xlu0 %v987, 96
        %v992 = vpop.permute.xlu0 %991
        %995 = vst.msk [vmem:[#allocation2 + $0x10] sm:$0xff] %vm906, %v990
        %996 = vst.msk [vmem:[#allocation2 + $0x30] sm:$0x1] %vm908, %v992
        %v998 = vrot.slane %v837, 4
        %v999 = vrot.slane %v842, 4
        %v1000 = vsel %vm911, %v998, %v999
        %1003 = vst.msk [vmem:[#allocation2 + $0x18] sm:$0xff] %vm860, %v1000
        %1004 = vst.msk [vmem:[#allocation2 + $0x38] sm:$0x1] %vm862, %v999
        %v1006 = vrot.slane %v842, 5
        %v1007 = vrot.slane %v847, 5
        %v1008 = vsel %vm920, %v1006, %v1007
        %1009 = vrot.lane.b32.xlu0 %v1008, 32
        %v1010 = vpop.permute.xlu0 %1009
        %1011 = vrot.lane.b32.xlu0 %v1007, 32
        %v1012 = vpop.permute.xlu0 %1011
        %1015 = vst.msk [vmem:[#allocation2 + $0x18] sm:$0xff] %vm876, %v1010
        %1016 = vst.msk [vmem:[#allocation2 + $0x38] sm:$0x1] %vm878, %v1012
        %v1018 = vrot.slane %v847, 6
        %v1019 = vrot.slane %v852, 6
        %v1020 = vsel %vm933, %v1018, %v1019
        %1021 = vrot.lane.b32.xlu0 %v1020, 64
        %v1022 = vpop.permute.xlu0 %1021
        %1023 = vrot.lane.b32.xlu0 %v1019, 64
        %v1024 = vpop.permute.xlu0 %1023
        %1027 = vst.msk [vmem:[#allocation2 + $0x18] sm:$0xff] %vm891, %v1022
        %1028 = vst.msk [vmem:[#allocation2 + $0x38] sm:$0x1] %vm893, %v1024
        %v1030 = vrot.slane %v852, 7
        %v1031 = vrot.slane %v857, 7
        %v1032 = vsel %vm946, %v1030, %v1031
        %1033 = vrot.lane.b32.xlu0 %v1032, 96
        %v1034 = vpop.permute.xlu0 %1033
        %1035 = vrot.lane.b32.xlu0 %v1031, 96
        %v1036 = vpop.permute.xlu0 %1035
        %1039 = vst.msk [vmem:[#allocation2 + $0x18] sm:$0xff] %vm906, %v1034
        %1040 = vst.msk [vmem:[#allocation2 + $0x38] sm:$0x1] %vm908, %v1036
        %v1041 = vld [vmem:[#allocation2] sm:$0xff]
        %v1042 = vld [vmem:[#allocation2 + $0x8] sm:$0xff]
        %v1043 = vld [vmem:[#allocation2 + $0x10] sm:$0xff]
        %v1044 = vld [vmem:[#allocation2 + $0x18] sm:$0xff]
        %v1045 = vld [vmem:[#allocation2 + $0x20] sm:$0x1]
        %v1046 = vld [vmem:[#allocation2 + $0x28] sm:$0x1]
        %v1047 = vld [vmem:[#allocation2 + $0x30] sm:$0x1]
        %v1048 = vld [vmem:[#allocation2 + $0x38] sm:$0x1]
        %v1049 = vld [vmem:[%s4] sm:$0xff]
        %v1050 = vld [vmem:[%s4 + $0x8] sm:$0xff]
        %v1051 = vld [vmem:[%s4 + $0x10] sm:$0xff]
        %v1052 = vld [vmem:[%s4 + $0x18] sm:$0xff]
        %v1053 = vld [vmem:[%s4 + $0x20] sm:$0xff]
        %v1054 = vld [vmem:[%s4 + $0x28] sm:$0xff]
        %v1055 = vld [vmem:[%s4 + $0x30] sm:$0xff]
        %v1056 = vld [vmem:[%s4 + $0x38] sm:$0xff]
        %v1057 = vld [vmem:[%s4 + $0x40] sm:$0xff]
        %v1058 = vld [vmem:[%s4 + $0x48] sm:$0xff]
        %v1059 = vld [vmem:[%s4 + $0x50] sm:$0xff]
        %v1060 = vld [vmem:[%s4 + $0x58] sm:$0xff]
        %v1061 = vld [vmem:[%s4 + $0x60] sm:$0xff]
        %v1062 = vld [vmem:[%s4 + $0x68] sm:$0xff]
        %v1063 = vld [vmem:[%s4 + $0x70] sm:$0xff]
        %v1064 = vld [vmem:[%s4 + $0x78] sm:$0xff]
        %v1065 = vld [vmem:[%s4 + $0x80] sm:$0xff]
        %v1066 = vld [vmem:[%s4 + $0x88] sm:$0xff]
        %v1067 = vld [vmem:[%s4 + $0x90] sm:$0xff]
        %v1068 = vld [vmem:[%s4 + $0x98] sm:$0xff]
        %v1069 = vld [vmem:[%s4 + $0xa0] sm:$0xff]
        %v1070 = vld [vmem:[%s4 + $0xa8] sm:$0xff]
        %v1071 = vld [vmem:[%s4 + $0xb0] sm:$0xff]
        %v1072 = vld [vmem:[%s4 + $0xb8] sm:$0xff]
        %v1073 = vld [vmem:[%s4 + $0xc0] sm:$0xff]
        %v1074 = vld [vmem:[%s4 + $0xc8] sm:$0xff]
        %v1075 = vld [vmem:[%s4 + $0xd0] sm:$0xff]
        %v1076 = vld [vmem:[%s4 + $0xd8] sm:$0xff]
        %v1077 = vld [vmem:[%s4 + $0xe0] sm:$0xff]
        %v1078 = vld [vmem:[%s4 + $0xe8] sm:$0xff]
        %v1079 = vld [vmem:[%s4 + $0xf0] sm:$0xff]
        %v1080 = vld [vmem:[%s4 + $0xf8] sm:$0xff]
        %v1081 = vld [vmem:[%s4 + $0x100] sm:$0xff]
        %v1082 = vld [vmem:[%s4 + $0x108] sm:$0xff]
        %v1083 = vld [vmem:[%s4 + $0x110] sm:$0xff]
        %v1084 = vld [vmem:[%s4 + $0x118] sm:$0xff]
        %v1085 = vld [vmem:[%s4 + $0x120] sm:$0xff]
        %v1086 = vld [vmem:[%s4 + $0x128] sm:$0xff]
        %v1087 = vld [vmem:[%s4 + $0x130] sm:$0xff]
        %v1088 = vld [vmem:[%s4 + $0x138] sm:$0xff]
        %v1089 = vld [vmem:[%s4 + $0x140] sm:$0xff]
        %v1090 = vld [vmem:[%s4 + $0x148] sm:$0xff]
        %v1091 = vld [vmem:[%s4 + $0x150] sm:$0xff]
        %v1092 = vld [vmem:[%s4 + $0x158] sm:$0xff]
        %v1093 = vld [vmem:[%s4 + $0x160] sm:$0xff]
        %v1094 = vld [vmem:[%s4 + $0x168] sm:$0xff]
        %v1095 = vld [vmem:[%s4 + $0x170] sm:$0xff]
        %v1096 = vld [vmem:[%s4 + $0x178] sm:$0xff]
        %v1097 = vld [vmem:[%s4 + $0x180] sm:$0xff]
        %v1098 = vld [vmem:[%s4 + $0x188] sm:$0xff]
        %v1099 = vld [vmem:[%s4 + $0x190] sm:$0xff]
        %v1100 = vld [vmem:[%s4 + $0x198] sm:$0xff]
        %v1101 = vld [vmem:[%s4 + $0x1a0] sm:$0xff]
        %v1102 = vld [vmem:[%s4 + $0x1a8] sm:$0xff]
        %v1103 = vld [vmem:[%s4 + $0x1b0] sm:$0xff]
        %v1104 = vld [vmem:[%s4 + $0x1b8] sm:$0xff]
        %v1105 = vld [vmem:[%s4 + $0x1c0] sm:$0xff]
        %v1106 = vld [vmem:[%s4 + $0x1c8] sm:$0xff]
        %v1107 = vld [vmem:[%s4 + $0x1d0] sm:$0xff]
        %v1108 = vld [vmem:[%s4 + $0x1d8] sm:$0xff]
        %v1109 = vld [vmem:[%s4 + $0x1e0] sm:$0xff]
        %v1110 = vld [vmem:[%s4 + $0x1e8] sm:$0xff]
        %v1111 = vld [vmem:[%s4 + $0x1f0] sm:$0xff]
        %v1112 = vld [vmem:[%s4 + $0x1f8] sm:$0xff]
        %v1113 = vld [vmem:[%s5] sm:$0x1]
        %v1115 = vlaneseq
        %v1116 = vshrl.u32 %v1115, 7
        %v1117 = vsub.s32 0, %v1116
        %v1118 = vrot.slane %v1113, %v1117
        %1120 = vmatprep.subr.mxu0 0.0
        %1121 = vmatpush1.msra.mxu0 %v1064
        %1122 = vmatprep.subr.mxu0 0.0
        %1123 = vmatpush1.msra.mxu0 %v1063
        %1124 = vmatprep.subr.mxu0 0.0
        %1125 = vmatpush1.msra.mxu0 %v1062
        %1126 = vmatprep.subr.mxu0 0.0
        %1127 = vmatpush1.msra.mxu0 %v1061
        %1128 = vmatprep.subr.mxu0 0.0
        %1129 = vmatpush1.msra.mxu0 %v1060
        %1130 = vmatprep.subr.mxu0 0.0
        %1131 = vmatpush1.msra.mxu0 %v1059
        %1132 = vmatprep.subr.mxu0 0.0
        %1133 = vmatpush1.msra.mxu0 %v1058
        %1134 = vmatprep.subr.mxu0 0.0
        %1135 = vmatpush1.msra.mxu0 %v1057
        %1136 = vmatprep.subr.mxu0 0.0
        %1137 = vmatpush1.msra.mxu0 %v1056
        %1138 = vmatprep.subr.mxu0 0.0
        %1139 = vmatpush1.msra.mxu0 %v1055
        %1140 = vmatprep.subr.mxu0 0.0
        %1141 = vmatpush1.msra.mxu0 %v1054
        %1142 = vmatprep.subr.mxu0 0.0
        %1143 = vmatpush1.msra.mxu0 %v1053
        %1144 = vmatprep.subr.mxu0 0.0
        %1145 = vmatpush1.msra.mxu0 %v1052
        %1146 = vmatprep.subr.mxu0 0.0
        %1147 = vmatpush1.msra.mxu0 %v1051
        %1148 = vmatprep.subr.mxu0 0.0
        %1149 = vmatpush1.msra.mxu0 %v1050
        %1150 = vmatprep.subr.mxu0 0.0
        %1151 = vmatpush1.msra.mxu0 %v1049
        %1152 = vmatprep.subr.mxu0 0.0
        %1153 = vmatpush2.msra.mxu0 %v1080
        %1154 = vmatprep.subr.mxu0 0.0
        %1155 = vmatpush2.msra.mxu0 %v1079
        %1156 = vmatprep.subr.mxu0 0.0
        %1157 = vmatpush2.msra.mxu0 %v1078
        %1158 = vmatprep.subr.mxu0 0.0
        %1159 = vmatpush2.msra.mxu0 %v1077
        %1160 = vmatprep.subr.mxu0 0.0
        %1161 = vmatpush2.msra.mxu0 %v1076
        %1162 = vmatprep.subr.mxu0 0.0
        %1163 = vmatpush2.msra.mxu0 %v1075
        %1164 = vmatprep.subr.mxu0 0.0
        %1165 = vmatpush2.msra.mxu0 %v1074
        %1166 = vmatprep.subr.mxu0 0.0
        %1167 = vmatpush2.msra.mxu0 %v1073
        %1168 = vmatprep.subr.mxu0 0.0
        %1169 = vmatpush2.msra.mxu0 %v1072
        %1170 = vmatprep.subr.mxu0 0.0
        %1171 = vmatpush2.msra.mxu0 %v1071
        %1172 = vmatprep.subr.mxu0 0.0
        %1173 = vmatpush2.msra.mxu0 %v1070
        %1174 = vmatprep.subr.mxu0 0.0
        %1175 = vmatpush2.msra.mxu0 %v1069
        %1176 = vmatprep.subr.mxu0 0.0
        %1177 = vmatpush2.msra.mxu0 %v1068
        %1178 = vmatprep.subr.mxu0 0.0
        %1179 = vmatpush2.msra.mxu0 %v1067
        %1180 = vmatprep.subr.mxu0 0.0
        %1181 = vmatpush2.msra.mxu0 %v1066
        %1182 = vmatprep.subr.mxu0 0.0
        %1183 = vmatpush2.msra.mxu0 %v1065
        %1184 = vmatprep.mubr.f32.mxu0 %v1042
        %1185 = vmatmul.mubr.f32.gmra.mxu0 %v1041
        %v1186 = vpop.f32.mrf.mxu0
        %v1187 = vadd.f32 %v1118, %v1186
        %v1188 = vpop.f32.mrf.mxu0
        %1189 = vmatprep.mubr.f32.mxu0 %v1046
        %1190 = vmatmul.mubr.f32.gmra.mxu0 %v1045
        %v1191 = vpop.f32.mrf.mxu0
        %v1192 = vadd.f32 %v1118, %v1191
        %v1193 = vpop.f32.mrf.mxu0
        %1194 = vdwg.mxu0
        %1195 = vmatprep.subr.mxu0 0.0
        %1196 = vmatpush1.msra.mxu0 %v1096
        %1197 = vmatprep.subr.mxu0 0.0
        %1198 = vmatpush1.msra.mxu0 %v1095
        %1199 = vmatprep.subr.mxu0 0.0
        %1200 = vmatpush1.msra.mxu0 %v1094
        %1201 = vmatprep.subr.mxu0 0.0
        %1202 = vmatpush1.msra.mxu0 %v1093
        %1203 = vmatprep.subr.mxu0 0.0
        %1204 = vmatpush1.msra.mxu0 %v1092
        %1205 = vmatprep.subr.mxu0 0.0
        %1206 = vmatpush1.msra.mxu0 %v1091
        %1207 = vmatprep.subr.mxu0 0.0
        %1208 = vmatpush1.msra.mxu0 %v1090
        %1209 = vmatprep.subr.mxu0 0.0
        %1210 = vmatpush1.msra.mxu0 %v1089
        %1211 = vmatprep.subr.mxu0 0.0
        %1212 = vmatpush1.msra.mxu0 %v1088
        %1213 = vmatprep.subr.mxu0 0.0
        %1214 = vmatpush1.msra.mxu0 %v1087
        %1215 = vmatprep.subr.mxu0 0.0
        %1216 = vmatpush1.msra.mxu0 %v1086
        %1217 = vmatprep.subr.mxu0 0.0
        %1218 = vmatpush1.msra.mxu0 %v1085
        %1219 = vmatprep.subr.mxu0 0.0
        %1220 = vmatpush1.msra.mxu0 %v1084
        %1221 = vmatprep.subr.mxu0 0.0
        %1222 = vmatpush1.msra.mxu0 %v1083
        %1223 = vmatprep.subr.mxu0 0.0
        %1224 = vmatpush1.msra.mxu0 %v1082
        %1225 = vmatprep.subr.mxu0 0.0
        %1226 = vmatpush1.msra.mxu0 %v1081
        %1227 = vmatprep.subr.mxu0 0.0
        %1228 = vmatpush2.msra.mxu0 %v1112
        %1229 = vmatprep.subr.mxu0 0.0
        %1230 = vmatpush2.msra.mxu0 %v1111
        %1231 = vmatprep.subr.mxu0 0.0
        %1232 = vmatpush2.msra.mxu0 %v1110
        %1233 = vmatprep.subr.mxu0 0.0
        %1234 = vmatpush2.msra.mxu0 %v1109
        %1235 = vmatprep.subr.mxu0 0.0
        %1236 = vmatpush2.msra.mxu0 %v1108
        %1237 = vmatprep.subr.mxu0 0.0
        %1238 = vmatpush2.msra.mxu0 %v1107
        %1239 = vmatprep.subr.mxu0 0.0
        %1240 = vmatpush2.msra.mxu0 %v1106
        %1241 = vmatprep.subr.mxu0 0.0
        %1242 = vmatpush2.msra.mxu0 %v1105
        %1243 = vmatprep.subr.mxu0 0.0
        %1244 = vmatpush2.msra.mxu0 %v1104
        %1245 = vmatprep.subr.mxu0 0.0
        %1246 = vmatpush2.msra.mxu0 %v1103
        %1247 = vmatprep.subr.mxu0 0.0
        %1248 = vmatpush2.msra.mxu0 %v1102
        %1249 = vmatprep.subr.mxu0 0.0
        %1250 = vmatpush2.msra.mxu0 %v1101
        %1251 = vmatprep.subr.mxu0 0.0
        %1252 = vmatpush2.msra.mxu0 %v1100
        %1253 = vmatprep.subr.mxu0 0.0
        %1254 = vmatpush2.msra.mxu0 %v1099
        %1255 = vmatprep.subr.mxu0 0.0
        %1256 = vmatpush2.msra.mxu0 %v1098
        %1257 = vmatprep.subr.mxu0 0.0
        %1258 = vmatpush2.msra.mxu0 %v1097
        %1259 = vmatprep.mubr.f32.mxu0 %v1044
        %1260 = vmatmul.mubr.f32.gmra.mxu0 %v1043
        %v1261 = vpop.f32.mrf.mxu0
        %v1262 = vadd.f32 %v1187, %v1261
        %v1263 = vpop.f32.mrf.mxu0
        %1264 = vmatprep.mubr.f32.mxu0 %v1048
        %1265 = vmatmul.mubr.f32.gmra.mxu0 %v1047
        %v1266 = vpop.f32.mrf.mxu0
        %v1267 = vadd.f32 %v1192, %v1266
        %v1268 = vpop.f32.mrf.mxu0
        %1269 = vdwg.mxu0
        %v1270 = vmax.f32 %v1262, 0.0
        %v1271 = vmax.f32 %v1267, 0.0
        %v1272 = vlaneseq
        %vm1273 = vcmp.ge.s32.totalorder %v1272, 0
        %vm1274 = vcmp.lt.s32.totalorder %v1272, 64
        %vm1275 = vmand %vm1273, %vm1274
        %1276 = vst.msk [vmem:[#allocation3] sm:$0x1] %vm1275, %v1270
        %v1279 = vunpack.c.l.s4 1966171168
        %v1280 = vunpack.c.0.s8 %v1279
        %v1281 = vlaneseq
        %v1282 = vshrl.u32 %v1281, 7
        %v1283 = vsub.s32 %v1280, %v1282
        %v1284 = vrot.slane %v1270, %v1283
        %v1285 = vcombine.high %v1284, %v1284
        %v1287 = vunpack.c.l.s4 1966171168
        %v1288 = vunpack.c.0.s8 %v1287
        %v1289 = vlaneseq
        %v1290 = vshrl.u32 %v1289, 7
        %v1291 = vsub.s32 %v1288, %v1290
        %v1292 = vrot.slane %v1284, %v1291
        %v1294 = vunpack.c.l.s4 1966171168
        %v1295 = vunpack.c.0.s8 %v1294
        %v1296 = vlaneseq
        %v1297 = vshrl.u32 %v1296, 7
        %v1298 = vsub.s32 %v1295, %v1297
        %v1299 = vrot.slane %v1285, %v1298
        %1300 = vrot.lane.b32.xlu0 %v1299, 64
        %v1301 = vpop.permute.xlu0 %1300
        %vm1303 = vcmp.ge.s32.totalorder %v1272, 64
        %vm1304 = vcmp.lt.s32.totalorder %v1272, 128
        %vm1305 = vmand %vm1303, %vm1304
        %1306 = vst.msk [vmem:[#allocation3] sm:$0x1] %vm1305, %v1301
        %v1307 = vcombine.high %v1292, %v1292
        %1309 = vst.msk [vmem:[#allocation3 + $0x1] sm:$0x1] %vm1275, %v1307
        %v1310 = vcombine.high %v1299, %v1299
        %1311 = vrot.lane.b32.xlu0 %v1310, 64
        %v1312 = vpop.permute.xlu0 %1311
        %1314 = vst.msk [vmem:[#allocation3 + $0x1] sm:$0x1] %vm1305, %v1312
        %v1315 = vcombine.high %v1270, %v1270
        %v1317 = vunpack.c.l.s4 1966171168
        %v1318 = vunpack.c.0.s8 %v1317
        %v1319 = vlaneseq
        %v1320 = vshrl.u32 %v1319, 7
        %v1321 = vsub.s32 %v1318, %v1320
        %v1322 = vrot.slane %v1315, %v1321
        %v1324 = vunpack.c.l.s4 1966171168
        %v1325 = vunpack.c.0.s8 %v1324
        %v1326 = vlaneseq
        %v1327 = vshrl.u32 %v1326, 7
        %v1328 = vsub.s32 %v1325, %v1327
        %v1329 = vrot.slane %v1322, %v1328
        %1331 = vst.msk [vmem:[#allocation3 + $0x2] sm:$0x1] %vm1275, %v1329
        %v1332 = vcombine.high %v1322, %v1322
        %v1334 = vunpack.c.l.s4 1966171168
        %v1335 = vunpack.c.0.s8 %v1334
        %v1336 = vlaneseq
        %v1337 = vshrl.u32 %v1336, 7
        %v1338 = vsub.s32 %v1335, %v1337
        %v1339 = vrot.slane %v1332, %v1338
        %1340 = vrot.lane.b32.xlu0 %v1339, 64
        %v1341 = vpop.permute.xlu0 %1340
        %1343 = vst.msk [vmem:[#allocation3 + $0x2] sm:$0x1] %vm1305, %v1341
        %v1344 = vcombine.high %v1329, %v1329
        %1346 = vst.msk [vmem:[#allocation3 + $0x3] sm:$0x1] %vm1275, %v1344
        %v1347 = vcombine.high %v1339, %v1339
        %1348 = vrot.lane.b32.xlu0 %v1347, 64
        %v1349 = vpop.permute.xlu0 %1348
        %1351 = vst.msk [vmem:[#allocation3 + $0x3] sm:$0x1] %vm1305, %v1349
        %1352 = vst.msk [vmem:[#allocation3 + $0x4] sm:$0x1] %vm1275, %v1271
        %v1353 = vld [vmem:[#allocation3] sm:$0x1f]
        %v1354 = vld [vmem:[%s6] sm:$0xff]
        %v1355 = vld [vmem:[%s6 + $0x8] sm:$0xff]
        %v1356 = vld [vmem:[%s6 + $0x10] sm:$0xff]
        %v1357 = vld [vmem:[%s6 + $0x18] sm:$0xff]
        %v1358 = vld [vmem:[%s6 + $0x20] sm:$0xff]
        %v1359 = vld [vmem:[%s6 + $0x28] sm:$0xff]
        %v1360 = vld [vmem:[%s6 + $0x30] sm:$0xff]
        %v1361 = vld [vmem:[%s6 + $0x38] sm:$0xff]
        %v1362 = vld [vmem:[%s6 + $0x40] sm:$0xff]
        %v1363 = vld [vmem:[%s6 + $0x48] sm:$0xff]
        %v1364 = vld [vmem:[%s6 + $0x50] sm:$0xff]
        %v1365 = vld [vmem:[%s6 + $0x58] sm:$0xff]
        %v1366 = vld [vmem:[%s6 + $0x60] sm:$0xff]
        %v1367 = vld [vmem:[%s6 + $0x68] sm:$0xff]
        %v1368 = vld [vmem:[%s6 + $0x70] sm:$0xff]
        %v1369 = vld [vmem:[%s6 + $0x78] sm:$0xff]
        %v1370 = vld [vmem:[%s6 + $0x80] sm:$0xff]
        %v1371 = vld [vmem:[%s6 + $0x88] sm:$0xff]
        %v1372 = vld [vmem:[%s6 + $0x90] sm:$0xff]
        %v1373 = vld [vmem:[%s6 + $0x98] sm:$0xff]
        %v1374 = vld [vmem:[%s6 + $0xa0] sm:$0xff]
        %v1375 = vld [vmem:[%s6 + $0xa8] sm:$0xff]
        %v1376 = vld [vmem:[%s6 + $0xb0] sm:$0xff]
        %v1377 = vld [vmem:[%s6 + $0xb8] sm:$0xff]
        %v1378 = vld [vmem:[%s6 + $0xc0] sm:$0xff]
        %v1379 = vld [vmem:[%s6 + $0xc8] sm:$0xff]
        %v1380 = vld [vmem:[%s6 + $0xd0] sm:$0xff]
        %v1381 = vld [vmem:[%s6 + $0xd8] sm:$0xff]
        %v1382 = vld [vmem:[%s6 + $0xe0] sm:$0xff]
        %v1383 = vld [vmem:[%s6 + $0xe8] sm:$0xff]
        %v1384 = vld [vmem:[%s6 + $0xf0] sm:$0xff]
        %v1385 = vld [vmem:[%s6 + $0xf8] sm:$0xff]
        %v1386 = vld [vmem:[%s6 + $0x100] sm:$0xff]
        %v1387 = vld [vmem:[%s6 + $0x108] sm:$0xff]
        %v1388 = vld [vmem:[%s6 + $0x110] sm:$0xff]
        %v1389 = vld [vmem:[%s6 + $0x118] sm:$0xff]
        %v1390 = vld [vmem:[%s6 + $0x120] sm:$0xff]
        %v1391 = vld [vmem:[%s6 + $0x128] sm:$0xff]
        %v1392 = vld [vmem:[%s6 + $0x130] sm:$0xff]
        %v1393 = vld [vmem:[%s6 + $0x138] sm:$0xff]
        %v1394 = vld [vmem:[%s6 + $0x140] sm:$0xff]
        %v1395 = vld [vmem:[%s6 + $0x148] sm:$0xff]
        %v1396 = vld [vmem:[%s6 + $0x150] sm:$0xff]
        %v1397 = vld [vmem:[%s6 + $0x158] sm:$0xff]
        %v1398 = vld [vmem:[%s6 + $0x160] sm:$0xff]
        %v1399 = vld [vmem:[%s6 + $0x168] sm:$0xff]
        %v1400 = vld [vmem:[%s6 + $0x170] sm:$0xff]
        %v1401 = vld [vmem:[%s6 + $0x178] sm:$0xff]
        %v1402 = vld [vmem:[%s6 + $0x180] sm:$0xff]
        %v1403 = vld [vmem:[%s6 + $0x188] sm:$0xff]
        %v1404 = vld [vmem:[%s6 + $0x190] sm:$0xff]
        %v1405 = vld [vmem:[%s6 + $0x198] sm:$0xff]
        %v1406 = vld [vmem:[%s6 + $0x1a0] sm:$0xff]
        %v1407 = vld [vmem:[%s6 + $0x1a8] sm:$0xff]
        %v1408 = vld [vmem:[%s6 + $0x1b0] sm:$0xff]
        %v1409 = vld [vmem:[%s6 + $0x1b8] sm:$0xff]
        %v1410 = vld [vmem:[%s6 + $0x1c0] sm:$0xff]
        %v1411 = vld [vmem:[%s6 + $0x1c8] sm:$0xff]
        %v1412 = vld [vmem:[%s6 + $0x1d0] sm:$0xff]
        %v1413 = vld [vmem:[%s6 + $0x1d8] sm:$0xff]
        %v1414 = vld [vmem:[%s6 + $0x1e0] sm:$0xff]
        %v1415 = vld [vmem:[%s6 + $0x1e8] sm:$0xff]
        %v1416 = vld [vmem:[%s6 + $0x1f0] sm:$0xff]
        %v1417 = vld [vmem:[%s6 + $0x1f8] sm:$0xff]
        %v1418 = vld [vmem:[%s6 + $0x200] sm:$0xff]
        %v1419 = vld [vmem:[%s6 + $0x208] sm:$0xff]
        %v1420 = vld [vmem:[%s6 + $0x210] sm:$0xff]
        %v1421 = vld [vmem:[%s6 + $0x218] sm:$0xff]
        %v1422 = vld [vmem:[%s6 + $0x220] sm:$0xff]
        %v1423 = vld [vmem:[%s6 + $0x228] sm:$0xff]
        %v1424 = vld [vmem:[%s6 + $0x230] sm:$0xff]
        %v1425 = vld [vmem:[%s6 + $0x238] sm:$0xff]
        %v1426 = vld [vmem:[%s7] sm:$0x1]
        %v1428 = vlaneseq
        %v1429 = vshrl.u32 %v1428, 7
        %v1430 = vsub.s32 0, %v1429
        %v1431 = vrot.slane %v1353, %v1430
        %v1432 = vlaneseq
        %v1433 = vshrl.u32 %v1432, 7
        %v1434 = vsub.s32 1, %v1433
        %v1435 = vrot.slane %v1353, %v1434
        %v1436 = vlaneseq
        %v1437 = vshrl.u32 %v1436, 7
        %v1438 = vsub.s32 2, %v1437
        %v1439 = vrot.slane %v1353, %v1438
        %v1440 = vlaneseq
        %v1441 = vshrl.u32 %v1440, 7
        %v1442 = vsub.s32 3, %v1441
        %v1443 = vrot.slane %v1353, %v1442
        %v1444 = vlaneseq
        %v1445 = vshrl.u32 %v1444, 7
        %v1446 = vsub.s32 4, %v1445
        %v1447 = vrot.slane %v1353, %v1446
        %v1452 = vsel %vm650, %v1447, 0
        %1454 = vmatprep.subr.mxu0 0.0
        %1455 = vmatpush1.msra.mxu0 %v1369
        %1456 = vmatprep.subr.mxu0 0.0
        %1457 = vmatpush1.msra.mxu0 %v1368
        %1458 = vmatprep.subr.mxu0 0.0
        %1459 = vmatpush1.msra.mxu0 %v1367
        %1460 = vmatprep.subr.mxu0 0.0
        %1461 = vmatpush1.msra.mxu0 %v1366
        %1462 = vmatprep.subr.mxu0 0.0
        %1463 = vmatpush1.msra.mxu0 %v1365
        %1464 = vmatprep.subr.mxu0 0.0
        %1465 = vmatpush1.msra.mxu0 %v1364
        %1466 = vmatprep.subr.mxu0 0.0
        %1467 = vmatpush1.msra.mxu0 %v1363
        %1468 = vmatprep.subr.mxu0 0.0
        %1469 = vmatpush1.msra.mxu0 %v1362
        %1470 = vmatprep.subr.mxu0 0.0
        %1471 = vmatpush1.msra.mxu0 %v1361
        %1472 = vmatprep.subr.mxu0 0.0
        %1473 = vmatpush1.msra.mxu0 %v1360
        %1474 = vmatprep.subr.mxu0 0.0
        %1475 = vmatpush1.msra.mxu0 %v1359
        %1476 = vmatprep.subr.mxu0 0.0
        %1477 = vmatpush1.msra.mxu0 %v1358
        %1478 = vmatprep.subr.mxu0 0.0
        %1479 = vmatpush1.msra.mxu0 %v1357
        %1480 = vmatprep.subr.mxu0 0.0
        %1481 = vmatpush1.msra.mxu0 %v1356
        %1482 = vmatprep.subr.mxu0 0.0
        %1483 = vmatpush1.msra.mxu0 %v1355
        %1484 = vmatprep.subr.mxu0 0.0
        %1485 = vmatpush1.msra.mxu0 %v1354
        %1486 = vmatprep.subr.mxu0 0.0
        %1487 = vmatpush2.msra.mxu0 %v1385
        %1488 = vmatprep.subr.mxu0 0.0
        %1489 = vmatpush2.msra.mxu0 %v1384
        %1490 = vmatprep.subr.mxu0 0.0
        %1491 = vmatpush2.msra.mxu0 %v1383
        %1492 = vmatprep.subr.mxu0 0.0
        %1493 = vmatpush2.msra.mxu0 %v1382
        %1494 = vmatprep.subr.mxu0 0.0
        %1495 = vmatpush2.msra.mxu0 %v1381
        %1496 = vmatprep.subr.mxu0 0.0
        %1497 = vmatpush2.msra.mxu0 %v1380
        %1498 = vmatprep.subr.mxu0 0.0
        %1499 = vmatpush2.msra.mxu0 %v1379
        %1500 = vmatprep.subr.mxu0 0.0
        %1501 = vmatpush2.msra.mxu0 %v1378
        %1502 = vmatprep.subr.mxu0 0.0
        %1503 = vmatpush2.msra.mxu0 %v1377
        %1504 = vmatprep.subr.mxu0 0.0
        %1505 = vmatpush2.msra.mxu0 %v1376
        %1506 = vmatprep.subr.mxu0 0.0
        %1507 = vmatpush2.msra.mxu0 %v1375
        %1508 = vmatprep.subr.mxu0 0.0
        %1509 = vmatpush2.msra.mxu0 %v1374
        %1510 = vmatprep.subr.mxu0 0.0
        %1511 = vmatpush2.msra.mxu0 %v1373
        %1512 = vmatprep.subr.mxu0 0.0
        %1513 = vmatpush2.msra.mxu0 %v1372
        %1514 = vmatprep.subr.mxu0 0.0
        %1515 = vmatpush2.msra.mxu0 %v1371
        %1516 = vmatprep.subr.mxu0 0.0
        %1517 = vmatpush2.msra.mxu0 %v1370
        %1518 = vmatprep.mubr.f32.mxu0 %v1435
        %1519 = vmatmul.mubr.f32.gmra.mxu0 %v1431
        %v1520 = vpop.f32.mrf.mxu0
        %v1521 = vadd.f32 %v1426, %v1520
        %v1522 = vpop.f32.mrf.mxu0
        %1523 = vdwg.mxu0
        %1524 = vmatprep.subr.mxu0 0.0
        %1525 = vmatpush1.msra.mxu0 %v1401
        %1526 = vmatprep.subr.mxu0 0.0
        %1527 = vmatpush1.msra.mxu0 %v1400
        %1528 = vmatprep.subr.mxu0 0.0
        %1529 = vmatpush1.msra.mxu0 %v1399
        %1530 = vmatprep.subr.mxu0 0.0
        %1531 = vmatpush1.msra.mxu0 %v1398
        %1532 = vmatprep.subr.mxu0 0.0
        %1533 = vmatpush1.msra.mxu0 %v1397
        %1534 = vmatprep.subr.mxu0 0.0
        %1535 = vmatpush1.msra.mxu0 %v1396
        %1536 = vmatprep.subr.mxu0 0.0
        %1537 = vmatpush1.msra.mxu0 %v1395
        %1538 = vmatprep.subr.mxu0 0.0
        %1539 = vmatpush1.msra.mxu0 %v1394
        %1540 = vmatprep.subr.mxu0 0.0
        %1541 = vmatpush1.msra.mxu0 %v1393
        %1542 = vmatprep.subr.mxu0 0.0
        %1543 = vmatpush1.msra.mxu0 %v1392
        %1544 = vmatprep.subr.mxu0 0.0
        %1545 = vmatpush1.msra.mxu0 %v1391
        %1546 = vmatprep.subr.mxu0 0.0
        %1547 = vmatpush1.msra.mxu0 %v1390
        %1548 = vmatprep.subr.mxu0 0.0
        %1549 = vmatpush1.msra.mxu0 %v1389
        %1550 = vmatprep.subr.mxu0 0.0
        %1551 = vmatpush1.msra.mxu0 %v1388
        %1552 = vmatprep.subr.mxu0 0.0
        %1553 = vmatpush1.msra.mxu0 %v1387
        %1554 = vmatprep.subr.mxu0 0.0
        %1555 = vmatpush1.msra.mxu0 %v1386
        %1556 = vmatprep.subr.mxu0 0.0
        %1557 = vmatpush2.msra.mxu0 %v1417
        %1558 = vmatprep.subr.mxu0 0.0
        %1559 = vmatpush2.msra.mxu0 %v1416
        %1560 = vmatprep.subr.mxu0 0.0
        %1561 = vmatpush2.msra.mxu0 %v1415
        %1562 = vmatprep.subr.mxu0 0.0
        %1563 = vmatpush2.msra.mxu0 %v1414
        %1564 = vmatprep.subr.mxu0 0.0
        %1565 = vmatpush2.msra.mxu0 %v1413
        %1566 = vmatprep.subr.mxu0 0.0
        %1567 = vmatpush2.msra.mxu0 %v1412
        %1568 = vmatprep.subr.mxu0 0.0
        %1569 = vmatpush2.msra.mxu0 %v1411
        %1570 = vmatprep.subr.mxu0 0.0
        %1571 = vmatpush2.msra.mxu0 %v1410
        %1572 = vmatprep.subr.mxu0 0.0
        %1573 = vmatpush2.msra.mxu0 %v1409
        %1574 = vmatprep.subr.mxu0 0.0
        %1575 = vmatpush2.msra.mxu0 %v1408
        %1576 = vmatprep.subr.mxu0 0.0
        %1577 = vmatpush2.msra.mxu0 %v1407
        %1578 = vmatprep.subr.mxu0 0.0
        %1579 = vmatpush2.msra.mxu0 %v1406
        %1580 = vmatprep.subr.mxu0 0.0
        %1581 = vmatpush2.msra.mxu0 %v1405
        %1582 = vmatprep.subr.mxu0 0.0
        %1583 = vmatpush2.msra.mxu0 %v1404
        %1584 = vmatprep.subr.mxu0 0.0
        %1585 = vmatpush2.msra.mxu0 %v1403
        %1586 = vmatprep.subr.mxu0 0.0
        %1587 = vmatpush2.msra.mxu0 %v1402
        %1588 = vmatprep.mubr.f32.mxu0 %v1443
        %1589 = vmatmul.mubr.f32.gmra.mxu0 %v1439
        %v1590 = vpop.f32.mrf.mxu0
        %v1591 = vadd.f32 %v1521, %v1590
        %v1592 = vpop.f32.mrf.mxu0
        %1593 = vdwg.mxu0
        %1594 = vmatprep.subr.mxu0 0.0
        %1595 = vmatpush1.msra.mxu0 0.0
        %1596 = vmatprep.subr.mxu0 0.0
        %1597 = vmatpush1.msra.mxu0 0.0
        %1598 = vmatprep.subr.mxu0 0.0
        %1599 = vmatpush1.msra.mxu0 0.0
        %1600 = vmatprep.subr.mxu0 0.0
        %1601 = vmatpush1.msra.mxu0 0.0
        %1602 = vmatprep.subr.mxu0 0.0
        %1603 = vmatpush1.msra.mxu0 0.0
        %1604 = vmatprep.subr.mxu0 0.0
        %1605 = vmatpush1.msra.mxu0 0.0
        %1606 = vmatprep.subr.mxu0 0.0
        %1607 = vmatpush1.msra.mxu0 0.0
        %1608 = vmatprep.subr.mxu0 0.0
        %1609 = vmatpush1.msra.mxu0 0.0
        %1610 = vmatprep.subr.mxu0 0.0
        %1611 = vmatpush1.msra.mxu0 %v1425
        %1612 = vmatprep.subr.mxu0 0.0
        %1613 = vmatpush1.msra.mxu0 %v1424
        %1614 = vmatprep.subr.mxu0 0.0
        %1615 = vmatpush1.msra.mxu0 %v1423
        %1616 = vmatprep.subr.mxu0 0.0
        %1617 = vmatpush1.msra.mxu0 %v1422
        %1618 = vmatprep.subr.mxu0 0.0
        %1619 = vmatpush1.msra.mxu0 %v1421
        %1620 = vmatprep.subr.mxu0 0.0
        %1621 = vmatpush1.msra.mxu0 %v1420
        %1622 = vmatprep.subr.mxu0 0.0
        %1623 = vmatpush1.msra.mxu0 %v1419
        %1624 = vmatprep.subr.mxu0 0.0
        %1625 = vmatpush1.msra.mxu0 %v1418
        %1626 = vmatprep.subr.mxu0 0.0
        %1627 = vmatpush2.msra.mxu0 0.0
        %1628 = vmatprep.subr.mxu0 0.0
        %1629 = vmatpush2.msra.mxu0 0.0
        %1630 = vmatprep.subr.mxu0 0.0
        %1631 = vmatpush2.msra.mxu0 0.0
        %1632 = vmatprep.subr.mxu0 0.0
        %1633 = vmatpush2.msra.mxu0 0.0
        %1634 = vmatprep.subr.mxu0 0.0
        %1635 = vmatpush2.msra.mxu0 0.0
        %1636 = vmatprep.subr.mxu0 0.0
        %1637 = vmatpush2.msra.mxu0 0.0
        %1638 = vmatprep.subr.mxu0 0.0
        %1639 = vmatpush2.msra.mxu0 0.0
        %1640 = vmatprep.subr.mxu0 0.0
        %1641 = vmatpush2.msra.mxu0 0.0
        %1642 = vmatprep.subr.mxu0 0.0
        %1643 = vmatpush2.msra.mxu0 0.0
        %1644 = vmatprep.subr.mxu0 0.0
        %1645 = vmatpush2.msra.mxu0 0.0
        %1646 = vmatprep.subr.mxu0 0.0
        %1647 = vmatpush2.msra.mxu0 0.0
        %1648 = vmatprep.subr.mxu0 0.0
        %1649 = vmatpush2.msra.mxu0 0.0
        %1650 = vmatprep.subr.mxu0 0.0
        %1651 = vmatpush2.msra.mxu0 0.0
        %1652 = vmatprep.subr.mxu0 0.0
        %1653 = vmatpush2.msra.mxu0 0.0
        %1654 = vmatprep.subr.mxu0 0.0
        %1655 = vmatpush2.msra.mxu0 0.0
        %1656 = vmatprep.subr.mxu0 0.0
        %1657 = vmatpush2.msra.mxu0 0.0
        %1658 = vmatprep.mubr.f32.mxu0 0.0
        %1659 = vmatmul.mubr.f32.gmra.mxu0 %v1452
        %v1660 = vpop.f32.mrf.mxu0
        %v1661 = vadd.f32 %v1591, %v1660
        %v1662 = vpop.f32.mrf.mxu0
        %1663 = vdwg.mxu0
        %v1664 = vmax.f32 %v1661, 0.0
        %v1665 = vld [vmem:[%s8] sm:$0xff]
        %v1666 = vld [vmem:[%s8 + $0x8] sm:$0xff]
        %v1667 = vld [vmem:[%s8 + $0x10] sm:$0xff]
        %v1668 = vld [vmem:[%s8 + $0x18] sm:$0xff]
        %v1669 = vld [vmem:[%s8 + $0x20] sm:$0xff]
        %v1670 = vld [vmem:[%s8 + $0x28] sm:$0xff]
        %v1671 = vld [vmem:[%s8 + $0x30] sm:$0xff]
        %v1672 = vld [vmem:[%s8 + $0x38] sm:$0xff]
        %v1673 = vld [vmem:[%s8 + $0x40] sm:$0xff]
        %v1674 = vld [vmem:[%s8 + $0x48] sm:$0xff]
        %v1675 = vld [vmem:[%s8 + $0x50] sm:$0xff]
        %v1676 = vld [vmem:[%s8 + $0x58] sm:$0xff]
        %v1677 = vld [vmem:[%s8 + $0x60] sm:$0xff]
        %v1678 = vld [vmem:[%s8 + $0x68] sm:$0xff]
        %v1679 = vld [vmem:[%s8 + $0x70] sm:$0xff]
        %v1680 = vld [vmem:[%s8 + $0x78] sm:$0xff]
        %v1681 = vld [vmem:[%s8 + $0x80] sm:$0xff]
        %v1682 = vld [vmem:[%s8 + $0x88] sm:$0xff]
        %v1683 = vld [vmem:[%s8 + $0x90] sm:$0xff]
        %v1684 = vld [vmem:[%s8 + $0x98] sm:$0xff]
        %v1685 = vld [vmem:[%s8 + $0xa0] sm:$0xff]
        %v1686 = vld [vmem:[%s8 + $0xa8] sm:$0xff]
        %v1687 = vld [vmem:[%s8 + $0xb0] sm:$0xff]
        %v1688 = vld [vmem:[%s8 + $0xb8] sm:$0xff]
        %v1689 = vld [vmem:[%s8 + $0xc0] sm:$0xff]
        %v1690 = vld [vmem:[%s8 + $0xc8] sm:$0xff]
        %v1691 = vld [vmem:[%s8 + $0xd0] sm:$0xff]
        %v1692 = vld [vmem:[%s8 + $0xd8] sm:$0xff]
        %v1693 = vld [vmem:[%s8 + $0xe0] sm:$0xff]
        %v1694 = vld [vmem:[%s8 + $0xe8] sm:$0xff]
        %v1695 = vld [vmem:[%s8 + $0xf0] sm:$0xff]
        %v1696 = vld [vmem:[%s8 + $0xf8] sm:$0xff]
        %v1697 = vld [vmem:[%s8 + $0x100] sm:$0xff]
        %v1698 = vld [vmem:[%s8 + $0x108] sm:$0xff]
        %v1699 = vld [vmem:[%s8 + $0x110] sm:$0xff]
        %v1700 = vld [vmem:[%s8 + $0x118] sm:$0xff]
        %v1701 = vld [vmem:[%s8 + $0x120] sm:$0xff]
        %v1702 = vld [vmem:[%s8 + $0x128] sm:$0xff]
        %v1703 = vld [vmem:[%s8 + $0x130] sm:$0xff]
        %v1704 = vld [vmem:[%s8 + $0x138] sm:$0xff]
        %v1705 = vld [vmem:[%s8 + $0x140] sm:$0xff]
        %v1706 = vld [vmem:[%s8 + $0x148] sm:$0xff]
        %v1707 = vld [vmem:[%s8 + $0x150] sm:$0xff]
        %v1708 = vld [vmem:[%s8 + $0x158] sm:$0xff]
        %v1709 = vld [vmem:[%s8 + $0x160] sm:$0xff]
        %v1710 = vld [vmem:[%s8 + $0x168] sm:$0xff]
        %v1711 = vld [vmem:[%s8 + $0x170] sm:$0xff]
        %v1712 = vld [vmem:[%s8 + $0x178] sm:$0xff]
        %v1713 = vld [vmem:[%s8 + $0x180] sm:$0xff]
        %v1714 = vld [vmem:[%s8 + $0x188] sm:$0xff]
        %v1715 = vld [vmem:[%s8 + $0x190] sm:$0xff]
        %v1716 = vld [vmem:[%s8 + $0x198] sm:$0xff]
        %v1717 = vld [vmem:[%s8 + $0x1a0] sm:$0xff]
        %v1718 = vld [vmem:[%s8 + $0x1a8] sm:$0xff]
        %v1719 = vld [vmem:[%s8 + $0x1b0] sm:$0xff]
        %v1720 = vld [vmem:[%s8 + $0x1b8] sm:$0xff]
        %v1721 = vld [vmem:[%s8 + $0x1c0] sm:$0xff]
        %v1722 = vld [vmem:[%s8 + $0x1c8] sm:$0xff]
        %v1723 = vld [vmem:[%s8 + $0x1d0] sm:$0xff]
        %v1724 = vld [vmem:[%s8 + $0x1d8] sm:$0xff]
        %v1725 = vld [vmem:[%s8 + $0x1e0] sm:$0xff]
        %v1726 = vld [vmem:[%s8 + $0x1e8] sm:$0xff]
        %v1727 = vld [vmem:[%s8 + $0x1f0] sm:$0xff]
        %v1728 = vld [vmem:[%s8 + $0x1f8] sm:$0xff]
        %v1729 = vld [vmem:[%s9] sm:$0xff]
        %v1731 = vlaneseq
        %v1732 = vshrl.u32 %v1731, 7
        %v1733 = vsub.s32 0, %v1732
        %v1734 = vrot.slane %v1729, %v1733
        %v1735 = vlaneseq
        %v1736 = vshrl.u32 %v1735, 7
        %v1737 = vsub.s32 1, %v1736
        %v1738 = vrot.slane %v1729, %v1737
        %v1739 = vlaneseq
        %v1740 = vshrl.u32 %v1739, 7
        %v1741 = vsub.s32 2, %v1740
        %v1742 = vrot.slane %v1729, %v1741
        %v1743 = vlaneseq
        %v1744 = vshrl.u32 %v1743, 7
        %v1745 = vsub.s32 3, %v1744
        %v1746 = vrot.slane %v1729, %v1745
        %v1747 = vlaneseq
        %v1748 = vshrl.u32 %v1747, 7
        %v1749 = vsub.s32 4, %v1748
        %v1750 = vrot.slane %v1729, %v1749
        %v1751 = vlaneseq
        %v1752 = vshrl.u32 %v1751, 7
        %v1753 = vsub.s32 5, %v1752
        %v1754 = vrot.slane %v1729, %v1753
        %v1755 = vlaneseq
        %v1756 = vshrl.u32 %v1755, 7
        %v1757 = vsub.s32 6, %v1756
        %v1758 = vrot.slane %v1729, %v1757
        %v1759 = vlaneseq
        %v1760 = vshrl.u32 %v1759, 7
        %v1761 = vsub.s32 7, %v1760
        %v1762 = vrot.slane %v1729, %v1761
        %v1772 = vsel %vm650, %v1664, 0
        %1774 = vmatprep.subr.mxu0 0.0
        %1775 = vmatpush1.msra.mxu0 0.0
        %1776 = vmatprep.subr.mxu0 0.0
        %1777 = vmatpush1.msra.mxu0 0.0
        %1778 = vmatprep.subr.mxu0 0.0
        %1779 = vmatpush1.msra.mxu0 0.0
        %1780 = vmatprep.subr.mxu0 0.0
        %1781 = vmatpush1.msra.mxu0 0.0
        %1782 = vmatprep.subr.mxu0 0.0
        %1783 = vmatpush1.msra.mxu0 0.0
        %1784 = vmatprep.subr.mxu0 0.0
        %1785 = vmatpush1.msra.mxu0 0.0
        %1786 = vmatprep.subr.mxu0 0.0
        %1787 = vmatpush1.msra.mxu0 0.0
        %1788 = vmatprep.subr.mxu0 0.0
        %1789 = vmatpush1.msra.mxu0 0.0
        %1790 = vmatprep.subr.mxu0 %v1722
        %1791 = vmatpush1.msra.mxu0 %v1721
        %1792 = vmatprep.subr.mxu0 %v1714
        %1793 = vmatpush1.msra.mxu0 %v1713
        %1794 = vmatprep.subr.mxu0 %v1706
        %1795 = vmatpush1.msra.mxu0 %v1705
        %1796 = vmatprep.subr.mxu0 %v1698
        %1797 = vmatpush1.msra.mxu0 %v1697
        %1798 = vmatprep.subr.mxu0 %v1690
        %1799 = vmatpush1.msra.mxu0 %v1689
        %1800 = vmatprep.subr.mxu0 %v1682
        %1801 = vmatpush1.msra.mxu0 %v1681
        %1802 = vmatprep.subr.mxu0 %v1674
        %1803 = vmatpush1.msra.mxu0 %v1673
        %1804 = vmatprep.subr.mxu0 %v1666
        %1805 = vmatpush1.msra.mxu0 %v1665
        %1806 = vmatprep.subr.mxu0 0.0
        %1807 = vmatpush2.msra.mxu0 0.0
        %1808 = vmatprep.subr.mxu0 0.0
        %1809 = vmatpush2.msra.mxu0 0.0
        %1810 = vmatprep.subr.mxu0 0.0
        %1811 = vmatpush2.msra.mxu0 0.0
        %1812 = vmatprep.subr.mxu0 0.0
        %1813 = vmatpush2.msra.mxu0 0.0
        %1814 = vmatprep.subr.mxu0 0.0
        %1815 = vmatpush2.msra.mxu0 0.0
        %1816 = vmatprep.subr.mxu0 0.0
        %1817 = vmatpush2.msra.mxu0 0.0
        %1818 = vmatprep.subr.mxu0 0.0
        %1819 = vmatpush2.msra.mxu0 0.0
        %1820 = vmatprep.subr.mxu0 0.0
        %1821 = vmatpush2.msra.mxu0 0.0
        %1822 = vmatprep.subr.mxu0 0.0
        %1823 = vmatpush2.msra.mxu0 0.0
        %1824 = vmatprep.subr.mxu0 0.0
        %1825 = vmatpush2.msra.mxu0 0.0
        %1826 = vmatprep.subr.mxu0 0.0
        %1827 = vmatpush2.msra.mxu0 0.0
        %1828 = vmatprep.subr.mxu0 0.0
        %1829 = vmatpush2.msra.mxu0 0.0
        %1830 = vmatprep.subr.mxu0 0.0
        %1831 = vmatpush2.msra.mxu0 0.0
        %1832 = vmatprep.subr.mxu0 0.0
        %1833 = vmatpush2.msra.mxu0 0.0
        %1834 = vmatprep.subr.mxu0 0.0
        %1835 = vmatpush2.msra.mxu0 0.0
        %1836 = vmatprep.subr.mxu0 0.0
        %1837 = vmatpush2.msra.mxu0 0.0
        %1838 = vmatprep.mubr.f32.mxu0 0.0
        %1839 = vmatmul.mubr.f32.gmra.mxu0 %v1772
        %v1840 = vpop.f32.mrf.mxu0
        %v1841 = vadd.f32 %v1734, %v1840
        %v1842 = vpop.f32.mrf.mxu0
        %v1843 = vadd.f32 %v1738, %v1842
        %1844 = vdwg.mxu0
        %1845 = vmatprep.subr.mxu0 0.0
        %1846 = vmatpush1.msra.mxu0 0.0
        %1847 = vmatprep.subr.mxu0 0.0
        %1848 = vmatpush1.msra.mxu0 0.0
        %1849 = vmatprep.subr.mxu0 0.0
        %1850 = vmatpush1.msra.mxu0 0.0
        %1851 = vmatprep.subr.mxu0 0.0
        %1852 = vmatpush1.msra.mxu0 0.0
        %1853 = vmatprep.subr.mxu0 0.0
        %1854 = vmatpush1.msra.mxu0 0.0
        %1855 = vmatprep.subr.mxu0 0.0
        %1856 = vmatpush1.msra.mxu0 0.0
        %1857 = vmatprep.subr.mxu0 0.0
        %1858 = vmatpush1.msra.mxu0 0.0
        %1859 = vmatprep.subr.mxu0 0.0
        %1860 = vmatpush1.msra.mxu0 0.0
        %1861 = vmatprep.subr.mxu0 %v1724
        %1862 = vmatpush1.msra.mxu0 %v1723
        %1863 = vmatprep.subr.mxu0 %v1716
        %1864 = vmatpush1.msra.mxu0 %v1715
        %1865 = vmatprep.subr.mxu0 %v1708
        %1866 = vmatpush1.msra.mxu0 %v1707
        %1867 = vmatprep.subr.mxu0 %v1700
        %1868 = vmatpush1.msra.mxu0 %v1699
        %1869 = vmatprep.subr.mxu0 %v1692
        %1870 = vmatpush1.msra.mxu0 %v1691
        %1871 = vmatprep.subr.mxu0 %v1684
        %1872 = vmatpush1.msra.mxu0 %v1683
        %1873 = vmatprep.subr.mxu0 %v1676
        %1874 = vmatpush1.msra.mxu0 %v1675
        %1875 = vmatprep.subr.mxu0 %v1668
        %1876 = vmatpush1.msra.mxu0 %v1667
        %1877 = vmatprep.subr.mxu0 0.0
        %1878 = vmatpush2.msra.mxu0 0.0
        %1879 = vmatprep.subr.mxu0 0.0
        %1880 = vmatpush2.msra.mxu0 0.0
        %1881 = vmatprep.subr.mxu0 0.0
        %1882 = vmatpush2.msra.mxu0 0.0
        %1883 = vmatprep.subr.mxu0 0.0
        %1884 = vmatpush2.msra.mxu0 0.0
        %1885 = vmatprep.subr.mxu0 0.0
        %1886 = vmatpush2.msra.mxu0 0.0
        %1887 = vmatprep.subr.mxu0 0.0
        %1888 = vmatpush2.msra.mxu0 0.0
        %1889 = vmatprep.subr.mxu0 0.0
        %1890 = vmatpush2.msra.mxu0 0.0
        %1891 = vmatprep.subr.mxu0 0.0
        %1892 = vmatpush2.msra.mxu0 0.0
        %1893 = vmatprep.subr.mxu0 0.0
        %1894 = vmatpush2.msra.mxu0 0.0
        %1895 = vmatprep.subr.mxu0 0.0
        %1896 = vmatpush2.msra.mxu0 0.0
        %1897 = vmatprep.subr.mxu0 0.0
        %1898 = vmatpush2.msra.mxu0 0.0
        %1899 = vmatprep.subr.mxu0 0.0
        %1900 = vmatpush2.msra.mxu0 0.0
        %1901 = vmatprep.subr.mxu0 0.0
        %1902 = vmatpush2.msra.mxu0 0.0
        %1903 = vmatprep.subr.mxu0 0.0
        %1904 = vmatpush2.msra.mxu0 0.0
        %1905 = vmatprep.subr.mxu0 0.0
        %1906 = vmatpush2.msra.mxu0 0.0
        %1907 = vmatprep.subr.mxu0 0.0
        %1908 = vmatpush2.msra.mxu0 0.0
        %1909 = vmatprep.mubr.f32.mxu0 0.0
        %1910 = vmatmul.mubr.f32.gmra.mxu0 %v1772
        %v1911 = vpop.f32.mrf.mxu0
        %v1912 = vadd.f32 %v1742, %v1911
        %v1913 = vpop.f32.mrf.mxu0
        %v1914 = vadd.f32 %v1746, %v1913
        %1915 = vdwg.mxu0
        %1916 = vmatprep.subr.mxu0 0.0
        %1917 = vmatpush1.msra.mxu0 0.0
        %1918 = vmatprep.subr.mxu0 0.0
        %1919 = vmatpush1.msra.mxu0 0.0
        %1920 = vmatprep.subr.mxu0 0.0
        %1921 = vmatpush1.msra.mxu0 0.0
        %1922 = vmatprep.subr.mxu0 0.0
        %1923 = vmatpush1.msra.mxu0 0.0
        %1924 = vmatprep.subr.mxu0 0.0
        %1925 = vmatpush1.msra.mxu0 0.0
        %1926 = vmatprep.subr.mxu0 0.0
        %1927 = vmatpush1.msra.mxu0 0.0
        %1928 = vmatprep.subr.mxu0 0.0
        %1929 = vmatpush1.msra.mxu0 0.0
        %1930 = vmatprep.subr.mxu0 0.0
        %1931 = vmatpush1.msra.mxu0 0.0
        %1932 = vmatprep.subr.mxu0 %v1726
        %1933 = vmatpush1.msra.mxu0 %v1725
        %1934 = vmatprep.subr.mxu0 %v1718
        %1935 = vmatpush1.msra.mxu0 %v1717
        %1936 = vmatprep.subr.mxu0 %v1710
        %1937 = vmatpush1.msra.mxu0 %v1709
        %1938 = vmatprep.subr.mxu0 %v1702
        %1939 = vmatpush1.msra.mxu0 %v1701
        %1940 = vmatprep.subr.mxu0 %v1694
        %1941 = vmatpush1.msra.mxu0 %v1693
        %1942 = vmatprep.subr.mxu0 %v1686
        %1943 = vmatpush1.msra.mxu0 %v1685
        %1944 = vmatprep.subr.mxu0 %v1678
        %1945 = vmatpush1.msra.mxu0 %v1677
        %1946 = vmatprep.subr.mxu0 %v1670
        %1947 = vmatpush1.msra.mxu0 %v1669
        %1948 = vmatprep.subr.mxu0 0.0
        %1949 = vmatpush2.msra.mxu0 0.0
        %1950 = vmatprep.subr.mxu0 0.0
        %1951 = vmatpush2.msra.mxu0 0.0
        %1952 = vmatprep.subr.mxu0 0.0
        %1953 = vmatpush2.msra.mxu0 0.0
        %1954 = vmatprep.subr.mxu0 0.0
        %1955 = vmatpush2.msra.mxu0 0.0
        %1956 = vmatprep.subr.mxu0 0.0
        %1957 = vmatpush2.msra.mxu0 0.0
        %1958 = vmatprep.subr.mxu0 0.0
        %1959 = vmatpush2.msra.mxu0 0.0
        %1960 = vmatprep.subr.mxu0 0.0
        %1961 = vmatpush2.msra.mxu0 0.0
        %1962 = vmatprep.subr.mxu0 0.0
        %1963 = vmatpush2.msra.mxu0 0.0
        %1964 = vmatprep.subr.mxu0 0.0
        %1965 = vmatpush2.msra.mxu0 0.0
        %1966 = vmatprep.subr.mxu0 0.0
        %1967 = vmatpush2.msra.mxu0 0.0
        %1968 = vmatprep.subr.mxu0 0.0
        %1969 = vmatpush2.msra.mxu0 0.0
        %1970 = vmatprep.subr.mxu0 0.0
        %1971 = vmatpush2.msra.mxu0 0.0
        %1972 = vmatprep.subr.mxu0 0.0
        %1973 = vmatpush2.msra.mxu0 0.0
        %1974 = vmatprep.subr.mxu0 0.0
        %1975 = vmatpush2.msra.mxu0 0.0
        %1976 = vmatprep.subr.mxu0 0.0
        %1977 = vmatpush2.msra.mxu0 0.0
        %1978 = vmatprep.subr.mxu0 0.0
        %1979 = vmatpush2.msra.mxu0 0.0
        %1980 = vmatprep.mubr.f32.mxu0 0.0
        %1981 = vmatmul.mubr.f32.gmra.mxu0 %v1772
        %v1982 = vpop.f32.mrf.mxu0
        %v1983 = vadd.f32 %v1750, %v1982
        %v1984 = vpop.f32.mrf.mxu0
        %v1985 = vadd.f32 %v1754, %v1984
        %1986 = vdwg.mxu0
        %1987 = vmatprep.subr.mxu0 0.0
        %1988 = vmatpush1.msra.mxu0 0.0
        %1989 = vmatprep.subr.mxu0 0.0
        %1990 = vmatpush1.msra.mxu0 0.0
        %1991 = vmatprep.subr.mxu0 0.0
        %1992 = vmatpush1.msra.mxu0 0.0
        %1993 = vmatprep.subr.mxu0 0.0
        %1994 = vmatpush1.msra.mxu0 0.0
        %1995 = vmatprep.subr.mxu0 0.0
        %1996 = vmatpush1.msra.mxu0 0.0
        %1997 = vmatprep.subr.mxu0 0.0
        %1998 = vmatpush1.msra.mxu0 0.0
        %1999 = vmatprep.subr.mxu0 0.0
        %2000 = vmatpush1.msra.mxu0 0.0
        %2001 = vmatprep.subr.mxu0 0.0
        %2002 = vmatpush1.msra.mxu0 0.0
        %2003 = vmatprep.subr.mxu0 %v1728
        %2004 = vmatpush1.msra.mxu0 %v1727
        %2005 = vmatprep.subr.mxu0 %v1720
        %2006 = vmatpush1.msra.mxu0 %v1719
        %2007 = vmatprep.subr.mxu0 %v1712
        %2008 = vmatpush1.msra.mxu0 %v1711
        %2009 = vmatprep.subr.mxu0 %v1704
        %2010 = vmatpush1.msra.mxu0 %v1703
        %2011 = vmatprep.subr.mxu0 %v1696
        %2012 = vmatpush1.msra.mxu0 %v1695
        %2013 = vmatprep.subr.mxu0 %v1688
        %2014 = vmatpush1.msra.mxu0 %v1687
        %2015 = vmatprep.subr.mxu0 %v1680
        %2016 = vmatpush1.msra.mxu0 %v1679
        %2017 = vmatprep.subr.mxu0 %v1672
        %2018 = vmatpush1.msra.mxu0 %v1671
        %2019 = vmatprep.subr.mxu0 0.0
        %2020 = vmatpush2.msra.mxu0 0.0
        %2021 = vmatprep.subr.mxu0 0.0
        %2022 = vmatpush2.msra.mxu0 0.0
        %2023 = vmatprep.subr.mxu0 0.0
        %2024 = vmatpush2.msra.mxu0 0.0
        %2025 = vmatprep.subr.mxu0 0.0
        %2026 = vmatpush2.msra.mxu0 0.0
        %2027 = vmatprep.subr.mxu0 0.0
        %2028 = vmatpush2.msra.mxu0 0.0
        %2029 = vmatprep.subr.mxu0 0.0
        %2030 = vmatpush2.msra.mxu0 0.0
        %2031 = vmatprep.subr.mxu0 0.0
        %2032 = vmatpush2.msra.mxu0 0.0
        %2033 = vmatprep.subr.mxu0 0.0
        %2034 = vmatpush2.msra.mxu0 0.0
        %2035 = vmatprep.subr.mxu0 0.0
        %2036 = vmatpush2.msra.mxu0 0.0
        %2037 = vmatprep.subr.mxu0 0.0
        %2038 = vmatpush2.msra.mxu0 0.0
        %2039 = vmatprep.subr.mxu0 0.0
        %2040 = vmatpush2.msra.mxu0 0.0
        %2041 = vmatprep.subr.mxu0 0.0
        %2042 = vmatpush2.msra.mxu0 0.0
        %2043 = vmatprep.subr.mxu0 0.0
        %2044 = vmatpush2.msra.mxu0 0.0
        %2045 = vmatprep.subr.mxu0 0.0
        %2046 = vmatpush2.msra.mxu0 0.0
        %2047 = vmatprep.subr.mxu0 0.0
        %2048 = vmatpush2.msra.mxu0 0.0
        %2049 = vmatprep.subr.mxu0 0.0
        %2050 = vmatpush2.msra.mxu0 0.0
        %2051 = vmatprep.mubr.f32.mxu0 0.0
        %2052 = vmatmul.mubr.f32.gmra.mxu0 %v1772
        %v2053 = vpop.f32.mrf.mxu0
        %v2054 = vadd.f32 %v1758, %v2053
        %v2055 = vpop.f32.mrf.mxu0
        %v2056 = vadd.f32 %v1762, %v2055
        %2057 = vdwg.mxu0
        %v2058 = vmax.f32 %v1841, 0.0
        %v2059 = vmax.f32 %v1843, 0.0
        %v2060 = vmax.f32 %v1912, 0.0
        %v2061 = vmax.f32 %v1914, 0.0
        %v2062 = vmax.f32 %v1983, 0.0
        %v2063 = vmax.f32 %v1985, 0.0
        %v2064 = vmax.f32 %v2054, 0.0
        %v2065 = vmax.f32 %v2056, 0.0
        %v2066 = vld [vmem:[%s10] sm:$0xff]
        %v2067 = vld [vmem:[%s10 + $0x8] sm:$0xff]
        %v2068 = vld [vmem:[%s10 + $0x10] sm:$0xff]
        %v2069 = vld [vmem:[%s10 + $0x18] sm:$0xff]
        %v2070 = vld [vmem:[%s10 + $0x20] sm:$0xff]
        %v2071 = vld [vmem:[%s10 + $0x28] sm:$0xff]
        %v2072 = vld [vmem:[%s10 + $0x30] sm:$0xff]
        %v2073 = vld [vmem:[%s10 + $0x38] sm:$0xff]
        %v2074 = vld [vmem:[%s10 + $0x40] sm:$0xff]
        %v2075 = vld [vmem:[%s10 + $0x48] sm:$0xff]
        %v2076 = vld [vmem:[%s10 + $0x50] sm:$0xff]
        %v2077 = vld [vmem:[%s10 + $0x58] sm:$0xff]
        %v2078 = vld [vmem:[%s10 + $0x60] sm:$0xff]
        %v2079 = vld [vmem:[%s10 + $0x68] sm:$0xff]
        %v2080 = vld [vmem:[%s10 + $0x70] sm:$0xff]
        %v2081 = vld [vmem:[%s10 + $0x78] sm:$0xff]
        %v2082 = vld [vmem:[%s10 + $0x80] sm:$0xff]
        %v2083 = vld [vmem:[%s10 + $0x88] sm:$0xff]
        %v2084 = vld [vmem:[%s10 + $0x90] sm:$0xff]
        %v2085 = vld [vmem:[%s10 + $0x98] sm:$0xff]
        %v2086 = vld [vmem:[%s10 + $0xa0] sm:$0xff]
        %v2087 = vld [vmem:[%s10 + $0xa8] sm:$0xff]
        %v2088 = vld [vmem:[%s10 + $0xb0] sm:$0xff]
        %v2089 = vld [vmem:[%s10 + $0xb8] sm:$0xff]
        %v2090 = vld [vmem:[%s10 + $0xc0] sm:$0xff]
        %v2091 = vld [vmem:[%s10 + $0xc8] sm:$0xff]
        %v2092 = vld [vmem:[%s10 + $0xd0] sm:$0xff]
        %v2093 = vld [vmem:[%s10 + $0xd8] sm:$0xff]
        %v2094 = vld [vmem:[%s10 + $0xe0] sm:$0xff]
        %v2095 = vld [vmem:[%s10 + $0xe8] sm:$0xff]
        %v2096 = vld [vmem:[%s10 + $0xf0] sm:$0xff]
        %v2097 = vld [vmem:[%s10 + $0xf8] sm:$0xff]
        %v2098 = vld [vmem:[%s10 + $0x100] sm:$0xff]
        %v2099 = vld [vmem:[%s10 + $0x108] sm:$0xff]
        %v2100 = vld [vmem:[%s10 + $0x110] sm:$0xff]
        %v2101 = vld [vmem:[%s10 + $0x118] sm:$0xff]
        %v2102 = vld [vmem:[%s10 + $0x120] sm:$0xff]
        %v2103 = vld [vmem:[%s10 + $0x128] sm:$0xff]
        %v2104 = vld [vmem:[%s10 + $0x130] sm:$0xff]
        %v2105 = vld [vmem:[%s10 + $0x138] sm:$0xff]
        %v2106 = vld [vmem:[%s10 + $0x140] sm:$0xff]
        %v2107 = vld [vmem:[%s10 + $0x148] sm:$0xff]
        %v2108 = vld [vmem:[%s10 + $0x150] sm:$0xff]
        %v2109 = vld [vmem:[%s10 + $0x158] sm:$0xff]
        %v2110 = vld [vmem:[%s10 + $0x160] sm:$0xff]
        %v2111 = vld [vmem:[%s10 + $0x168] sm:$0xff]
        %v2112 = vld [vmem:[%s10 + $0x170] sm:$0xff]
        %v2113 = vld [vmem:[%s10 + $0x178] sm:$0xff]
        %v2114 = vld [vmem:[%s10 + $0x180] sm:$0xff]
        %v2115 = vld [vmem:[%s10 + $0x188] sm:$0xff]
        %v2116 = vld [vmem:[%s10 + $0x190] sm:$0xff]
        %v2117 = vld [vmem:[%s10 + $0x198] sm:$0xff]
        %v2118 = vld [vmem:[%s10 + $0x1a0] sm:$0xff]
        %v2119 = vld [vmem:[%s10 + $0x1a8] sm:$0xff]
        %v2120 = vld [vmem:[%s10 + $0x1b0] sm:$0xff]
        %v2121 = vld [vmem:[%s10 + $0x1b8] sm:$0xff]
        %v2122 = vld [vmem:[%s10 + $0x1c0] sm:$0xff]
        %v2123 = vld [vmem:[%s10 + $0x1c8] sm:$0xff]
        %v2124 = vld [vmem:[%s10 + $0x1d0] sm:$0xff]
        %v2125 = vld [vmem:[%s10 + $0x1d8] sm:$0xff]
        %v2126 = vld [vmem:[%s10 + $0x1e0] sm:$0xff]
        %v2127 = vld [vmem:[%s10 + $0x1e8] sm:$0xff]
        %v2128 = vld [vmem:[%s10 + $0x1f0] sm:$0xff]
        %v2129 = vld [vmem:[%s10 + $0x1f8] sm:$0xff]
        %v2130 = vld [vmem:[%s10 + $0x200] sm:$0xff]
        %v2131 = vld [vmem:[%s10 + $0x208] sm:$0xff]
        %v2132 = vld [vmem:[%s10 + $0x210] sm:$0xff]
        %v2133 = vld [vmem:[%s10 + $0x218] sm:$0xff]
        %v2134 = vld [vmem:[%s10 + $0x220] sm:$0xff]
        %v2135 = vld [vmem:[%s10 + $0x228] sm:$0xff]
        %v2136 = vld [vmem:[%s10 + $0x230] sm:$0xff]
        %v2137 = vld [vmem:[%s10 + $0x238] sm:$0xff]
        %v2138 = vld [vmem:[%s10 + $0x240] sm:$0xff]
        %v2139 = vld [vmem:[%s10 + $0x248] sm:$0xff]
        %v2140 = vld [vmem:[%s10 + $0x250] sm:$0xff]
        %v2141 = vld [vmem:[%s10 + $0x258] sm:$0xff]
        %v2142 = vld [vmem:[%s10 + $0x260] sm:$0xff]
        %v2143 = vld [vmem:[%s10 + $0x268] sm:$0xff]
        %v2144 = vld [vmem:[%s10 + $0x270] sm:$0xff]
        %v2145 = vld [vmem:[%s10 + $0x278] sm:$0xff]
        %v2146 = vld [vmem:[%s10 + $0x280] sm:$0xff]
        %v2147 = vld [vmem:[%s10 + $0x288] sm:$0xff]
        %v2148 = vld [vmem:[%s10 + $0x290] sm:$0xff]
        %v2149 = vld [vmem:[%s10 + $0x298] sm:$0xff]
        %v2150 = vld [vmem:[%s10 + $0x2a0] sm:$0xff]
        %v2151 = vld [vmem:[%s10 + $0x2a8] sm:$0xff]
        %v2152 = vld [vmem:[%s10 + $0x2b0] sm:$0xff]
        %v2153 = vld [vmem:[%s10 + $0x2b8] sm:$0xff]
        %v2154 = vld [vmem:[%s10 + $0x2c0] sm:$0xff]
        %v2155 = vld [vmem:[%s10 + $0x2c8] sm:$0xff]
        %v2156 = vld [vmem:[%s10 + $0x2d0] sm:$0xff]
        %v2157 = vld [vmem:[%s10 + $0x2d8] sm:$0xff]
        %v2158 = vld [vmem:[%s10 + $0x2e0] sm:$0xff]
        %v2159 = vld [vmem:[%s10 + $0x2e8] sm:$0xff]
        %v2160 = vld [vmem:[%s10 + $0x2f0] sm:$0xff]
        %v2161 = vld [vmem:[%s10 + $0x2f8] sm:$0xff]
        %v2162 = vld [vmem:[%s10 + $0x300] sm:$0xff]
        %v2163 = vld [vmem:[%s10 + $0x308] sm:$0xff]
        %v2164 = vld [vmem:[%s10 + $0x310] sm:$0xff]
        %v2165 = vld [vmem:[%s10 + $0x318] sm:$0xff]
        %v2166 = vld [vmem:[%s10 + $0x320] sm:$0xff]
        %v2167 = vld [vmem:[%s10 + $0x328] sm:$0xff]
        %v2168 = vld [vmem:[%s10 + $0x330] sm:$0xff]
        %v2169 = vld [vmem:[%s10 + $0x338] sm:$0xff]
        %v2170 = vld [vmem:[%s10 + $0x340] sm:$0xff]
        %v2171 = vld [vmem:[%s10 + $0x348] sm:$0xff]
        %v2172 = vld [vmem:[%s10 + $0x350] sm:$0xff]
        %v2173 = vld [vmem:[%s10 + $0x358] sm:$0xff]
        %v2174 = vld [vmem:[%s10 + $0x360] sm:$0xff]
        %v2175 = vld [vmem:[%s10 + $0x368] sm:$0xff]
        %v2176 = vld [vmem:[%s10 + $0x370] sm:$0xff]
        %v2177 = vld [vmem:[%s10 + $0x378] sm:$0xff]
        %v2178 = vld [vmem:[%s10 + $0x380] sm:$0xff]
        %v2179 = vld [vmem:[%s10 + $0x388] sm:$0xff]
        %v2180 = vld [vmem:[%s10 + $0x390] sm:$0xff]
        %v2181 = vld [vmem:[%s10 + $0x398] sm:$0xff]
        %v2182 = vld [vmem:[%s10 + $0x3a0] sm:$0xff]
        %v2183 = vld [vmem:[%s10 + $0x3a8] sm:$0xff]
        %v2184 = vld [vmem:[%s10 + $0x3b0] sm:$0xff]
        %v2185 = vld [vmem:[%s10 + $0x3b8] sm:$0xff]
        %v2186 = vld [vmem:[%s10 + $0x3c0] sm:$0xff]
        %v2187 = vld [vmem:[%s10 + $0x3c8] sm:$0xff]
        %v2188 = vld [vmem:[%s10 + $0x3d0] sm:$0xff]
        %v2189 = vld [vmem:[%s10 + $0x3d8] sm:$0xff]
        %v2190 = vld [vmem:[%s10 + $0x3e0] sm:$0xff]
        %v2191 = vld [vmem:[%s10 + $0x3e8] sm:$0xff]
        %v2192 = vld [vmem:[%s10 + $0x3f0] sm:$0xff]
        %v2193 = vld [vmem:[%s10 + $0x3f8] sm:$0xff]
        %v2194 = vld [vmem:[%s11] sm:$0x1]
        %2195 = vmatprep.subr.mxu0 0.0
        %2196 = vmatpush1.msra.mxu0 %v2081
        %2197 = vmatprep.subr.mxu0 0.0
        %2198 = vmatpush1.msra.mxu0 %v2080
        %2199 = vmatprep.subr.mxu0 0.0
        %2200 = vmatpush1.msra.mxu0 %v2079
        %2201 = vmatprep.subr.mxu0 0.0
        %2202 = vmatpush1.msra.mxu0 %v2078
        %2203 = vmatprep.subr.mxu0 0.0
        %2204 = vmatpush1.msra.mxu0 %v2077
        %2205 = vmatprep.subr.mxu0 0.0
        %2206 = vmatpush1.msra.mxu0 %v2076
        %2207 = vmatprep.subr.mxu0 0.0
        %2208 = vmatpush1.msra.mxu0 %v2075
        %2209 = vmatprep.subr.mxu0 0.0
        %2210 = vmatpush1.msra.mxu0 %v2074
        %2211 = vmatprep.subr.mxu0 0.0
        %2212 = vmatpush1.msra.mxu0 %v2073
        %2213 = vmatprep.subr.mxu0 0.0
        %2214 = vmatpush1.msra.mxu0 %v2072
        %2215 = vmatprep.subr.mxu0 0.0
        %2216 = vmatpush1.msra.mxu0 %v2071
        %2217 = vmatprep.subr.mxu0 0.0
        %2218 = vmatpush1.msra.mxu0 %v2070
        %2219 = vmatprep.subr.mxu0 0.0
        %2220 = vmatpush1.msra.mxu0 %v2069
        %2221 = vmatprep.subr.mxu0 0.0
        %2222 = vmatpush1.msra.mxu0 %v2068
        %2223 = vmatprep.subr.mxu0 0.0
        %2224 = vmatpush1.msra.mxu0 %v2067
        %2225 = vmatprep.subr.mxu0 0.0
        %2226 = vmatpush1.msra.mxu0 %v2066
        %2227 = vmatprep.subr.mxu0 0.0
        %2228 = vmatpush2.msra.mxu0 %v2097
        %2229 = vmatprep.subr.mxu0 0.0
        %2230 = vmatpush2.msra.mxu0 %v2096
        %2231 = vmatprep.subr.mxu0 0.0
        %2232 = vmatpush2.msra.mxu0 %v2095
        %2233 = vmatprep.subr.mxu0 0.0
        %2234 = vmatpush2.msra.mxu0 %v2094
        %2235 = vmatprep.subr.mxu0 0.0
        %2236 = vmatpush2.msra.mxu0 %v2093
        %2237 = vmatprep.subr.mxu0 0.0
        %2238 = vmatpush2.msra.mxu0 %v2092
        %2239 = vmatprep.subr.mxu0 0.0
        %2240 = vmatpush2.msra.mxu0 %v2091
        %2241 = vmatprep.subr.mxu0 0.0
        %2242 = vmatpush2.msra.mxu0 %v2090
        %2243 = vmatprep.subr.mxu0 0.0
        %2244 = vmatpush2.msra.mxu0 %v2089
        %2245 = vmatprep.subr.mxu0 0.0
        %2246 = vmatpush2.msra.mxu0 %v2088
        %2247 = vmatprep.subr.mxu0 0.0
        %2248 = vmatpush2.msra.mxu0 %v2087
        %2249 = vmatprep.subr.mxu0 0.0
        %2250 = vmatpush2.msra.mxu0 %v2086
        %2251 = vmatprep.subr.mxu0 0.0
        %2252 = vmatpush2.msra.mxu0 %v2085
        %2253 = vmatprep.subr.mxu0 0.0
        %2254 = vmatpush2.msra.mxu0 %v2084
        %2255 = vmatprep.subr.mxu0 0.0
        %2256 = vmatpush2.msra.mxu0 %v2083
        %2257 = vmatprep.subr.mxu0 0.0
        %2258 = vmatpush2.msra.mxu0 %v2082
        %2259 = vmatprep.mubr.f32.mxu0 %v2059
        %2260 = vmatmul.mubr.f32.gmra.mxu0 %v2058
        %v2261 = vpop.f32.mrf.mxu0
        %v2262 = vadd.f32 %v2194, %v2261
        %v2263 = vpop.f32.mrf.mxu0
        %2264 = vdwg.mxu0
        %2265 = vmatprep.subr.mxu0 0.0
        %2266 = vmatpush1.msra.mxu0 %v2113
        %2267 = vmatprep.subr.mxu0 0.0
        %2268 = vmatpush1.msra.mxu0 %v2112
        %2269 = vmatprep.subr.mxu0 0.0
        %2270 = vmatpush1.msra.mxu0 %v2111
        %2271 = vmatprep.subr.mxu0 0.0
        %2272 = vmatpush1.msra.mxu0 %v2110
        %2273 = vmatprep.subr.mxu0 0.0
        %2274 = vmatpush1.msra.mxu0 %v2109
        %2275 = vmatprep.subr.mxu0 0.0
        %2276 = vmatpush1.msra.mxu0 %v2108
        %2277 = vmatprep.subr.mxu0 0.0
        %2278 = vmatpush1.msra.mxu0 %v2107
        %2279 = vmatprep.subr.mxu0 0.0
        %2280 = vmatpush1.msra.mxu0 %v2106
        %2281 = vmatprep.subr.mxu0 0.0
        %2282 = vmatpush1.msra.mxu0 %v2105
        %2283 = vmatprep.subr.mxu0 0.0
        %2284 = vmatpush1.msra.mxu0 %v2104
        %2285 = vmatprep.subr.mxu0 0.0
        %2286 = vmatpush1.msra.mxu0 %v2103
        %2287 = vmatprep.subr.mxu0 0.0
        %2288 = vmatpush1.msra.mxu0 %v2102
        %2289 = vmatprep.subr.mxu0 0.0
        %2290 = vmatpush1.msra.mxu0 %v2101
        %2291 = vmatprep.subr.mxu0 0.0
        %2292 = vmatpush1.msra.mxu0 %v2100
        %2293 = vmatprep.subr.mxu0 0.0
        %2294 = vmatpush1.msra.mxu0 %v2099
        %2295 = vmatprep.subr.mxu0 0.0
        %2296 = vmatpush1.msra.mxu0 %v2098
        %2297 = vmatprep.subr.mxu0 0.0
        %2298 = vmatpush2.msra.mxu0 %v2129
        %2299 = vmatprep.subr.mxu0 0.0
        %2300 = vmatpush2.msra.mxu0 %v2128
        %2301 = vmatprep.subr.mxu0 0.0
        %2302 = vmatpush2.msra.mxu0 %v2127
        %2303 = vmatprep.subr.mxu0 0.0
        %2304 = vmatpush2.msra.mxu0 %v2126
        %2305 = vmatprep.subr.mxu0 0.0
        %2306 = vmatpush2.msra.mxu0 %v2125
        %2307 = vmatprep.subr.mxu0 0.0
        %2308 = vmatpush2.msra.mxu0 %v2124
        %2309 = vmatprep.subr.mxu0 0.0
        %2310 = vmatpush2.msra.mxu0 %v2123
        %2311 = vmatprep.subr.mxu0 0.0
        %2312 = vmatpush2.msra.mxu0 %v2122
        %2313 = vmatprep.subr.mxu0 0.0
        %2314 = vmatpush2.msra.mxu0 %v2121
        %2315 = vmatprep.subr.mxu0 0.0
        %2316 = vmatpush2.msra.mxu0 %v2120
        %2317 = vmatprep.subr.mxu0 0.0
        %2318 = vmatpush2.msra.mxu0 %v2119
        %2319 = vmatprep.subr.mxu0 0.0
        %2320 = vmatpush2.msra.mxu0 %v2118
        %2321 = vmatprep.subr.mxu0 0.0
        %2322 = vmatpush2.msra.mxu0 %v2117
        %2323 = vmatprep.subr.mxu0 0.0
        %2324 = vmatpush2.msra.mxu0 %v2116
        %2325 = vmatprep.subr.mxu0 0.0
        %2326 = vmatpush2.msra.mxu0 %v2115
        %2327 = vmatprep.subr.mxu0 0.0
        %2328 = vmatpush2.msra.mxu0 %v2114
        %2329 = vmatprep.mubr.f32.mxu0 %v2061
        %2330 = vmatmul.mubr.f32.gmra.mxu0 %v2060
        %v2331 = vpop.f32.mrf.mxu0
        %v2332 = vadd.f32 %v2262, %v2331
        %v2333 = vpop.f32.mrf.mxu0
        %2334 = vdwg.mxu0
        %2335 = vmatprep.subr.mxu0 0.0
        %2336 = vmatpush1.msra.mxu0 %v2145
        %2337 = vmatprep.subr.mxu0 0.0
        %2338 = vmatpush1.msra.mxu0 %v2144
        %2339 = vmatprep.subr.mxu0 0.0
        %2340 = vmatpush1.msra.mxu0 %v2143
        %2341 = vmatprep.subr.mxu0 0.0
        %2342 = vmatpush1.msra.mxu0 %v2142
        %2343 = vmatprep.subr.mxu0 0.0
        %2344 = vmatpush1.msra.mxu0 %v2141
        %2345 = vmatprep.subr.mxu0 0.0
        %2346 = vmatpush1.msra.mxu0 %v2140
        %2347 = vmatprep.subr.mxu0 0.0
        %2348 = vmatpush1.msra.mxu0 %v2139
        %2349 = vmatprep.subr.mxu0 0.0
        %2350 = vmatpush1.msra.mxu0 %v2138
        %2351 = vmatprep.subr.mxu0 0.0
        %2352 = vmatpush1.msra.mxu0 %v2137
        %2353 = vmatprep.subr.mxu0 0.0
        %2354 = vmatpush1.msra.mxu0 %v2136
        %2355 = vmatprep.subr.mxu0 0.0
        %2356 = vmatpush1.msra.mxu0 %v2135
        %2357 = vmatprep.subr.mxu0 0.0
        %2358 = vmatpush1.msra.mxu0 %v2134
        %2359 = vmatprep.subr.mxu0 0.0
        %2360 = vmatpush1.msra.mxu0 %v2133
        %2361 = vmatprep.subr.mxu0 0.0
        %2362 = vmatpush1.msra.mxu0 %v2132
        %2363 = vmatprep.subr.mxu0 0.0
        %2364 = vmatpush1.msra.mxu0 %v2131
        %2365 = vmatprep.subr.mxu0 0.0
        %2366 = vmatpush1.msra.mxu0 %v2130
        %2367 = vmatprep.subr.mxu0 0.0
        %2368 = vmatpush2.msra.mxu0 %v2161
        %2369 = vmatprep.subr.mxu0 0.0
        %2370 = vmatpush2.msra.mxu0 %v2160
        %2371 = vmatprep.subr.mxu0 0.0
        %2372 = vmatpush2.msra.mxu0 %v2159
        %2373 = vmatprep.subr.mxu0 0.0
        %2374 = vmatpush2.msra.mxu0 %v2158
        %2375 = vmatprep.subr.mxu0 0.0
        %2376 = vmatpush2.msra.mxu0 %v2157
        %2377 = vmatprep.subr.mxu0 0.0
        %2378 = vmatpush2.msra.mxu0 %v2156
        %2379 = vmatprep.subr.mxu0 0.0
        %2380 = vmatpush2.msra.mxu0 %v2155
        %2381 = vmatprep.subr.mxu0 0.0
        %2382 = vmatpush2.msra.mxu0 %v2154
        %2383 = vmatprep.subr.mxu0 0.0
        %2384 = vmatpush2.msra.mxu0 %v2153
        %2385 = vmatprep.subr.mxu0 0.0
        %2386 = vmatpush2.msra.mxu0 %v2152
        %2387 = vmatprep.subr.mxu0 0.0
        %2388 = vmatpush2.msra.mxu0 %v2151
        %2389 = vmatprep.subr.mxu0 0.0
        %2390 = vmatpush2.msra.mxu0 %v2150
        %2391 = vmatprep.subr.mxu0 0.0
        %2392 = vmatpush2.msra.mxu0 %v2149
        %2393 = vmatprep.subr.mxu0 0.0
        %2394 = vmatpush2.msra.mxu0 %v2148
        %2395 = vmatprep.subr.mxu0 0.0
        %2396 = vmatpush2.msra.mxu0 %v2147
        %2397 = vmatprep.subr.mxu0 0.0
        %2398 = vmatpush2.msra.mxu0 %v2146
        %2399 = vmatprep.mubr.f32.mxu0 %v2063
        %2400 = vmatmul.mubr.f32.gmra.mxu0 %v2062
        %v2401 = vpop.f32.mrf.mxu0
        %v2402 = vadd.f32 %v2332, %v2401
        %v2403 = vpop.f32.mrf.mxu0
        %2404 = vdwg.mxu0
        %2405 = vmatprep.subr.mxu0 0.0
        %2406 = vmatpush1.msra.mxu0 %v2177
        %2407 = vmatprep.subr.mxu0 0.0
        %2408 = vmatpush1.msra.mxu0 %v2176
        %2409 = vmatprep.subr.mxu0 0.0
        %2410 = vmatpush1.msra.mxu0 %v2175
        %2411 = vmatprep.subr.mxu0 0.0
        %2412 = vmatpush1.msra.mxu0 %v2174
        %2413 = vmatprep.subr.mxu0 0.0
        %2414 = vmatpush1.msra.mxu0 %v2173
        %2415 = vmatprep.subr.mxu0 0.0
        %2416 = vmatpush1.msra.mxu0 %v2172
        %2417 = vmatprep.subr.mxu0 0.0
        %2418 = vmatpush1.msra.mxu0 %v2171
        %2419 = vmatprep.subr.mxu0 0.0
        %2420 = vmatpush1.msra.mxu0 %v2170
        %2421 = vmatprep.subr.mxu0 0.0
        %2422 = vmatpush1.msra.mxu0 %v2169
        %2423 = vmatprep.subr.mxu0 0.0
        %2424 = vmatpush1.msra.mxu0 %v2168
        %2425 = vmatprep.subr.mxu0 0.0
        %2426 = vmatpush1.msra.mxu0 %v2167
        %2427 = vmatprep.subr.mxu0 0.0
        %2428 = vmatpush1.msra.mxu0 %v2166
        %2429 = vmatprep.subr.mxu0 0.0
        %2430 = vmatpush1.msra.mxu0 %v2165
        %2431 = vmatprep.subr.mxu0 0.0
        %2432 = vmatpush1.msra.mxu0 %v2164
        %2433 = vmatprep.subr.mxu0 0.0
        %2434 = vmatpush1.msra.mxu0 %v2163
        %2435 = vmatprep.subr.mxu0 0.0
        %2436 = vmatpush1.msra.mxu0 %v2162
        %2437 = vmatprep.subr.mxu0 0.0
        %2438 = vmatpush2.msra.mxu0 %v2193
        %2439 = vmatprep.subr.mxu0 0.0
        %2440 = vmatpush2.msra.mxu0 %v2192
        %2441 = vmatprep.subr.mxu0 0.0
        %2442 = vmatpush2.msra.mxu0 %v2191
        %2443 = vmatprep.subr.mxu0 0.0
        %2444 = vmatpush2.msra.mxu0 %v2190
        %2445 = vmatprep.subr.mxu0 0.0
        %2446 = vmatpush2.msra.mxu0 %v2189
        %2447 = vmatprep.subr.mxu0 0.0
        %2448 = vmatpush2.msra.mxu0 %v2188
        %2449 = vmatprep.subr.mxu0 0.0
        %2450 = vmatpush2.msra.mxu0 %v2187
        %2451 = vmatprep.subr.mxu0 0.0
        %2452 = vmatpush2.msra.mxu0 %v2186
        %2453 = vmatprep.subr.mxu0 0.0
        %2454 = vmatpush2.msra.mxu0 %v2185
        %2455 = vmatprep.subr.mxu0 0.0
        %2456 = vmatpush2.msra.mxu0 %v2184
        %2457 = vmatprep.subr.mxu0 0.0
        %2458 = vmatpush2.msra.mxu0 %v2183
        %2459 = vmatprep.subr.mxu0 0.0
        %2460 = vmatpush2.msra.mxu0 %v2182
        %2461 = vmatprep.subr.mxu0 0.0
        %2462 = vmatpush2.msra.mxu0 %v2181
        %2463 = vmatprep.subr.mxu0 0.0
        %2464 = vmatpush2.msra.mxu0 %v2180
        %2465 = vmatprep.subr.mxu0 0.0
        %2466 = vmatpush2.msra.mxu0 %v2179
        %2467 = vmatprep.subr.mxu0 0.0
        %2468 = vmatpush2.msra.mxu0 %v2178
        %2469 = vmatprep.mubr.f32.mxu0 %v2065
        %2470 = vmatmul.mubr.f32.gmra.mxu0 %v2064
        %v2471 = vpop.f32.mrf.mxu0
        %v2472 = vadd.f32 %v2402, %v2471
        %v2473 = vpop.f32.mrf.mxu0
        %2474 = vdwg.mxu0
        %v2475 = vld [vmem:[%s12] sm:$0x1]
        %v2476 = vmul.f32 %v2472, %v2475
        %v2477 = vsel %vm946, %v2476, 0.0
        %2478 = vadd.xlane.f32.xlu0 %v2477
        %v2479 = vpop.xlane.xlu0 %2478
        %v2480 = vadd.f32 %v2472, %v2479
        %2481 = vst [vmem:[%s432] sm:$0x1] %v2480
        %s2482 = sand.u32 %s313, 1
        %s2483 = scalar_lea.sflag [#allocation5], %s2482
        %s2484 = sand.u32 %s313, 1
        %s2485 = scalar_lea.vmem [#allocation4], %s2484
        // Predicated region
        $region73: #{dueling_dqn_forward.1} parent=71 // pred_check
          %p2486 = pneg %p323
        $region74: #{dueling_dqn_forward.1} parent=71 // pred_check_branch
          %2488 = sbr.rel (%p2486) target = $region76
        $region75: #{dueling_dqn_forward.1} parent=71 // pred_region
          %s2490 = ssub.s32 16, 16
          %2491 = vsyncadd %s2483, %s2490
          %s2492 = smul.addr %s27, 16
          %s2493 = scalar_lea.hbm %s13, %s2492
          %s2495 = sshll.u32 %s2485, 4
          %s2496 = int_to_ptr.vmem [resolvable:$true] %s2495
          %2498 = dma.vmem_to_hbm [thread:$0]  %s2496, 16, %s2493, %s2483
        $region76: #{dueling_dqn_forward.1} parent=71 // pred_fallthru
          _
      $region72: #{dueling_dqn_forward.1} parent=5 // pred_fallthru
        _
      %p2499 = scmp.le.s32.totalorder 2, %s22
      // Predicated region
      $region77: #{dueling_dqn_forward.1} parent=5 // pred_check
        %p2500 = pneg %p2499
      $region78: #{dueling_dqn_forward.1} parent=5 // pred_check_branch
        %2502 = sbr.rel (%p2500) target = $region80
      $region79: #{dueling_dqn_forward.1} parent=5 // pred_region
        %s2503 = ssub.s32 %s22, 2
        // Predicated region
        $region81: #{dueling_dqn_forward.1} parent=79 // pred_check
          %p2504 = pneg %p329
        $region82: #{dueling_dqn_forward.1} parent=79 // pred_check_branch
          %2506 = sbr.rel (%p2504) target = $region84
        $region83: #{dueling_dqn_forward.1} parent=79 // pred_region
          %s2507 = sand.u32 %s314, 1
          %s2508 = scalar_lea.sflag [#allocation5], %s2507
          %s2509 = sand.u32 %s314, 1
          %s2510 = scalar_lea.vmem [#allocation4], %s2509
          %2511 = dma.done %s2508, 16
        $region84: #{dueling_dqn_forward.1} parent=79 // pred_fallthru
          _
      $region80: #{dueling_dqn_forward.1} parent=5 // pred_fallthru
        _
    $region6: #{dueling_dqn_forward.1} parent=1 // loop_footer
      %s26 = sadd.s32 1, %s22
    $region7: #{dueling_dqn_forward.1} parent=1 // loop_footer_branch
      %21 = sbr.rel target = $region3
    $region8: #{dueling_dqn_forward.1} parent=1 // loop_exit
      _
    %2512 = vsyncpa [#allocation5], 1
    %s2513 = scalar_lea.sflag [#allocation5], 1
    %2514 = vsyncpa %s2513, 1

</llo_original>
